<compile_context>
chip_gen: v7x
topology: tpu7x:2x2x1
jax: 0.10.0
libtpu: 0.0.40
codegen_flags: <defaults>
</compile_context>

<pallas_src>
import functools

import jax
import jax.numpy as jnp
from jax.experimental import pallas as pl
from jax.experimental.pallas import tpu as pltpu


def _round_up(x, m):
    return (x + m - 1) // m * m


def _quantile_kernel(x_ref, s_ref, w1_ref, b1_ref, w2_ref, b2_ref, out_ref, *,
                     state_dim):
    x = x_ref[...]                                            # (TB, in_dim_p) bf16

    # Hidden layer: sigmoid(x @ W1 + b1), f32 accumulation on the MXU.
    h = jnp.dot(x, w1_ref[...], preferred_element_type=jnp.float32) + b1_ref[...]
    h = jax.nn.sigmoid(h)

    # Output layer (bf16 operands, f32 accumulation); W2/b2 are zero-padded to
    # 128 lanes so this write is a full, unmasked lane-dense block.
    y = (jnp.dot(h.astype(w2_ref.dtype), w2_ref[...],
                 preferred_element_type=jnp.float32) + b2_ref[...])
    out_ref[...] = y
    # Residual (exact f32 state) only touches the valid leading lanes; this is
    # a cheap masked store into VMEM — the HBM writeback stays lane-dense.
    out_ref[:, :state_dim] += s_ref[...]


@functools.partial(jax.jit, static_argnames=("batch_tile", "param_dtype"))
def quantile_model_forward(state, action, w1, b1, w2, b2,
                           batch_tile=512, param_dtype=jnp.bfloat16):
    B, state_dim = state.shape
    action_dim = action.shape[1]
    in_dim = state_dim + action_dim
    hidden_dim = w1.shape[1]

    # Pad the contraction dim so bf16 sublane packing is clean (16-row groups).
    in_dim_p = _round_up(in_dim, 16)
    # Lane-dense output width.
    out_pad = max(128, _round_up(state_dim, 128))

    # ---- tile / grid selection (overhead + megacore balance) -------------
    tile = min(batch_tile, _round_up(B, 16))
    tile = _round_up(tile, 16)                       # bf16 sublane granularity
    grid_n = pl.cdiv(_round_up(B, 16), tile)
    if grid_n > 1 and grid_n % 2 == 1:
        grid_n += 1                                  # even grid for v7x 2-TC balance
    Bp = grid_n * tile

    # ---- operand prep -----------------------------------------------------
    x = jnp.concatenate([state, action], axis=1)
    x = jnp.pad(x, ((0, Bp - B), (0, in_dim_p - in_dim))).astype(param_dtype)
    state_p = jnp.pad(state.astype(jnp.float32), ((0, Bp - B), (0, 0)))

    w1c = jnp.pad(w1, ((0, in_dim_p - in_dim), (0, 0))).astype(param_dtype)
    b1c = b1.astype(jnp.float32).reshape(1, hidden_dim)
    w2c = jnp.pad(w2, ((0, 0), (0, out_pad - state_dim))).astype(param_dtype)
    b2c = jnp.pad(b2.astype(jnp.float32), (0, out_pad - state_dim)).reshape(1, out_pad)

    flops = 2 * Bp * (in_dim_p * hidden_dim + hidden_dim * out_pad) \
        + 2 * Bp * (hidden_dim + out_pad)
    bytes_accessed = (x.size * x.dtype.itemsize
                      + state_p.size * 4
                      + w1c.size * w1c.dtype.itemsize
                      + w2c.size * w2c.dtype.itemsize
                      + b1c.size * 4 + b2c.size * 4
                      + Bp * out_pad * 4)
    cost = pl.CostEstimate(flops=flops,
                           transcendentals=Bp * hidden_dim,
                           bytes_accessed=bytes_accessed)

    out = pl.pallas_call(
        functools.partial(_quantile_kernel, state_dim=state_dim),
        out_shape=jax.ShapeDtypeStruct((Bp, out_pad), jnp.float32),
        grid_spec=pltpu.PrefetchScalarGridSpec(
            num_scalar_prefetch=0,
            grid=(grid_n,),
            in_specs=[
                pl.BlockSpec((tile, in_dim_p), lambda i: (i, 0)),          # x (bf16)
                pl.BlockSpec((tile, state_dim), lambda i: (i, 0)),         # state (f32)
                pl.BlockSpec((in_dim_p, hidden_dim), lambda i: (0, 0)),    # W1
                pl.BlockSpec((1, hidden_dim), lambda i: (0, 0)),           # b1
                pl.BlockSpec((hidden_dim, out_pad), lambda i: (0, 0)),     # W2 (padded)
                pl.BlockSpec((1, out_pad), lambda i: (0, 0)),              # b2 (padded)
            ],
            out_specs=pl.BlockSpec((tile, out_pad), lambda i: (i, 0)),
        ),
        compiler_params=pltpu.CompilerParams(
            dimension_semantics=("parallel",),
            vmem_limit_bytes=32 * 1024 * 1024),
        cost_estimate=cost,
    )(x, state_p, w1c, b1c, w2c, b2c)

    return out[:B, :state_dim]


def _init_params(key, state_dim, action_dim, hidden_dim):
    """PyTorch-style uniform(-1/sqrt(fan_in), 1/sqrt(fan_in)) init (f32 master)."""
    in_dim = state_dim + action_dim
    k1, k2, k3, k4 = jax.random.split(key, 4)
    bound1 = 1.0 / jnp.sqrt(in_dim)
    bound2 = 1.0 / jnp.sqrt(hidden_dim)
    w1 = jax.random.uniform(k1, (in_dim, hidden_dim), jnp.float32, -bound1, bound1)
    b1 = jax.random.uniform(k2, (hidden_dim,), jnp.float32, -bound1, bound1)
    w2 = jax.random.uniform(k3, (hidden_dim, state_dim), jnp.float32, -bound2, bound2)
    b2 = jax.random.uniform(k4, (state_dim,), jnp.float32, -bound2, bound2)
    return w1, b1, w2, b2


def _reference(state, action, w1, b1, w2, b2, param_dtype=jnp.bfloat16):
    """Pure-JAX reference applying the same bf16 storage casts as the kernel.

    The residual is pure f32 state (matches both the kernel and the PyTorch
    model); the matmul operands carry the same bf16 storage rounding as the
    kernel's streamed inputs.
    """
    x = jnp.concatenate([state, action], axis=1).astype(param_dtype).astype(jnp.float32)
    w1f = w1.astype(param_dtype).astype(jnp.float32)
    w2f = w2.astype(param_dtype).astype(jnp.float32)
    h = jax.nn.sigmoid(x @ w1f + b1.reshape(1, -1))
    h = h.astype(param_dtype).astype(jnp.float32)
    y = h @ w2f + b2.reshape(1, -1)
    return state.astype(jnp.float32) + y


if __name__ == "__main__":
    state_dim, action_dim, hidden_dim = 16, 8, 128   # hidden_dim = module default
    batch = 1024                                     # -> grid of 2 tiles of 512

    key = jax.random.PRNGKey(0)
    k_p, k_s, k_a = jax.random.split(key, 3)
    w1, b1, w2, b2 = _init_params(k_p, state_dim, action_dim, hidden_dim)

    state = jax.random.normal(k_s, (batch, state_dim), jnp.float32)
    action = jax.random.normal(k_a, (batch, action_dim), jnp.float32)

    out = quantile_model_forward(state, action, w1, b1, w2, b2)
    out = jax.block_until_ready(out)

    ref = _reference(state, action, w1, b1, w2, b2)
    assert out.shape == (batch, state_dim)
    assert jnp.allclose(out, ref, atol=1e-3, rtol=1e-3), \
        float(jnp.max(jnp.abs(out - ref)))

    print("KERNEL_OK")
</pallas_src>

<mosaic_0001>
module attributes {stable_mosaic.version = 11 : i64} {
  func.func @_quantile_kernel(%arg0: i32, %arg1: memref<512x32xbf16, #tpu.memory_space<vmem>>, %arg2: memref<512x16xf32, #tpu.memory_space<vmem>>, %arg3: memref<32x128xbf16, #tpu.memory_space<vmem>>, %arg4: memref<1x128xf32, #tpu.memory_space<vmem>>, %arg5: memref<128x128xbf16, #tpu.memory_space<vmem>>, %arg6: memref<1x128xf32, #tpu.memory_space<vmem>>, %arg7: memref<512x128xf32, #tpu.memory_space<vmem>>) attributes {dimension_semantics = [#tpu.dimension_semantics<parallel>], iteration_bounds = array<i64: 2>, scalar_prefetch = 0 : i64, scratch_operands = 0 : i64, tpu.core_type = #tpu.core_type<tc>, window_params = [{transform_indices = @transform_0, window_bounds = array<i64: 512, 32>}, {transform_indices = @transform_1, window_bounds = array<i64: 512, 16>}, {pipeline_mode = #tpu.pipeline_mode<synchronous>, transform_indices = @transform_2, window_bounds = array<i64: 32, 128>}, {pipeline_mode = #tpu.pipeline_mode<synchronous>, transform_indices = @transform_3, window_bounds = array<i64: 1, 128>}, {pipeline_mode = #tpu.pipeline_mode<synchronous>, transform_indices = @transform_4, window_bounds = array<i64: 128, 128>}, {pipeline_mode = #tpu.pipeline_mode<synchronous>, transform_indices = @transform_5, window_bounds = array<i64: 1, 128>}, {transform_indices = @transform_6, window_bounds = array<i64: 512, 128>}]} {
    %c0 = arith.constant 0 : index
    %c0_0 = arith.constant 0 : index
    %0 = vector.load %arg1[%c0, %c0_0] : memref<512x32xbf16, #tpu.memory_space<vmem>>, vector<512x32xbf16>
    %c0_1 = arith.constant 0 : index
    %c0_2 = arith.constant 0 : index
    %1 = vector.load %arg3[%c0_1, %c0_2] : memref<32x128xbf16, #tpu.memory_space<vmem>>, vector<32x128xbf16>
    %cst = arith.constant dense<0.000000e+00> : vector<512x128xf32>
    %2 = tpu.matmul %0, %1, %cst {dimension_numbers = #tpu.dot_dimension_numbers<[1], [0], [0], [1], [0, 0, 1, 1], [], []>} : vector<512x32xbf16>, vector<32x128xbf16>, vector<512x128xf32> -> vector<512x128xf32>
    %c0_3 = arith.constant 0 : index
    %c0_4 = arith.constant 0 : index
    %3 = vector.load %arg4[%c0_3, %c0_4] : memref<1x128xf32, #tpu.memory_space<vmem>>, vector<1x128xf32>
    %4 = vector.broadcast %3 : vector<1x128xf32> to vector<512x128xf32>
    %5 = arith.addf %2, %4 : vector<512x128xf32>
    %6 = arith.negf %5 : vector<512x128xf32>
    %7 = math.exp %6 : vector<512x128xf32>
    %cst_5 = arith.constant 1.000000e+00 : f32
    %8 = vector.broadcast %cst_5 : f32 to vector<512x128xf32>
    %9 = arith.addf %8, %7 : vector<512x128xf32>
    %10 = arith.divf %8, %9 : vector<512x128xf32>
    %11 = arith.truncf %10 : vector<512x128xf32> to vector<512x128xbf16>
    %c0_6 = arith.constant 0 : index
    %c0_7 = arith.constant 0 : index
    %12 = vector.load %arg5[%c0_6, %c0_7] : memref<128x128xbf16, #tpu.memory_space<vmem>>, vector<128x128xbf16>
    %cst_8 = arith.constant dense<0.000000e+00> : vector<512x128xf32>
    %13 = tpu.matmul %11, %12, %cst_8 {dimension_numbers = #tpu.dot_dimension_numbers<[1], [0], [0], [1], [0, 0, 1, 1], [], []>} : vector<512x128xbf16>, vector<128x128xbf16>, vector<512x128xf32> -> vector<512x128xf32>
    %c0_9 = arith.constant 0 : index
    %c0_10 = arith.constant 0 : index
    %14 = vector.load %arg6[%c0_9, %c0_10] : memref<1x128xf32, #tpu.memory_space<vmem>>, vector<1x128xf32>
    %15 = vector.broadcast %14 : vector<1x128xf32> to vector<512x128xf32>
    %16 = arith.addf %13, %15 : vector<512x128xf32>
    %c0_11 = arith.constant 0 : index
    %c0_12 = arith.constant 0 : index
    %17 = vector.load %arg7[%c0_11, %c0_12] : memref<512x128xf32, #tpu.memory_space<vmem>>, vector<512x128xf32>
    tpu.vector_store %arg7[%c0_11, %c0_12], %16 {strides = array<i32>} : memref<512x128xf32, #tpu.memory_space<vmem>>, vector<512x128xf32>,
    %c0_13 = arith.constant 0 : index
    %c0_14 = arith.constant 0 : index
    %18 = vector.load %arg7[%c0_13, %c0_14] : memref<512x128xf32, #tpu.memory_space<vmem>>, vector<512x16xf32>
    %c0_15 = arith.constant 0 : index
    %c0_16 = arith.constant 0 : index
    %19 = vector.load %arg2[%c0_15, %c0_16] : memref<512x16xf32, #tpu.memory_space<vmem>>, vector<512x16xf32>
    %20 = arith.addf %18, %19 : vector<512x16xf32>
    %c0_17 = arith.constant 0 : index
    %c0_18 = arith.constant 0 : index
    %21 = vector.load %arg7[%c0_17, %c0_18] : memref<512x128xf32, #tpu.memory_space<vmem>>, vector<512x16xf32>
    tpu.vector_store %arg7[%c0_17, %c0_18], %20 {strides = array<i32>} : memref<512x128xf32, #tpu.memory_space<vmem>>, vector<512x16xf32>,
    return
  }
  func.func @transform_0(%arg0: i32) -> (i32, i32) {
    %c0_i32 = arith.constant 0 : i32
    %c0_i32_0 = arith.constant 0 : i32
    return %arg0, %c0_i32 : i32, i32
  }
  func.func @transform_1(%arg0: i32) -> (i32, i32) {
    %c0_i32 = arith.constant 0 : i32
    %c0_i32_0 = arith.constant 0 : i32
    return %arg0, %c0_i32 : i32, i32
  }
  func.func @transform_2(%arg0: i32) -> (i32, i32) {
    %c0_i32 = arith.constant 0 : i32
    %c0_i32_0 = arith.constant 0 : i32
    %c0_i32_1 = arith.constant 0 : i32
    return %c0_i32, %c0_i32_0 : i32, i32
  }
  func.func @transform_3(%arg0: i32) -> (i32, i32) {
    %c0_i32 = arith.constant 0 : i32
    %c0_i32_0 = arith.constant 0 : i32
    %c0_i32_1 = arith.constant 0 : i32
    return %c0_i32, %c0_i32_0 : i32, i32
  }
  func.func @transform_4(%arg0: i32) -> (i32, i32) {
    %c0_i32 = arith.constant 0 : i32
    %c0_i32_0 = arith.constant 0 : i32
    %c0_i32_1 = arith.constant 0 : i32
    return %c0_i32, %c0_i32_0 : i32, i32
  }
  func.func @transform_5(%arg0: i32) -> (i32, i32) {
    %c0_i32 = arith.constant 0 : i32
    %c0_i32_0 = arith.constant 0 : i32
    %c0_i32_1 = arith.constant 0 : i32
    return %c0_i32, %c0_i32_0 : i32, i32
  }
  func.func @transform_6(%arg0: i32) -> (i32, i32) {
    %c0_i32 = arith.constant 0 : i32
    %c0_i32_0 = arith.constant 0 : i32
    return %arg0, %c0_i32 : i32, i32
  }
}

</mosaic_0001>

<llo_original>
// kernel: quantile_model_forward.1
$region0: #{quantile_model_forward.1}
  #allocation0 [shape = 'u32[]', space=smem, size = 0x4, offset = 0x4, fixed_abs, tag = 'smem constant byte address 0x4 - core index']
  #allocation1 [shape = 'u32[144,128]{1,0:T(1,128)}', space=vmem, size = 0x12000, scoped, tag = 'internal scratch']
  %s0 = inlined_call_operand.vmem [shape: bf16[1024,32], index: 0, kind: input, shape index: {}]
  %s1 = inlined_call_operand.vmem [shape: f32[1024,16], index: 1, kind: input, shape index: {}]
  %s2 = inlined_call_operand.vmem [shape: bf16[32,128], index: 2, kind: input, shape index: {}]
  %s3 = inlined_call_operand.vmem [shape: f32[1,128], index: 3, kind: input, shape index: {}]
  %s4 = inlined_call_operand.vmem [shape: bf16[128,128], index: 4, kind: input, shape index: {}]
  %s5 = inlined_call_operand.vmem [shape: f32[1,128], index: 5, kind: input, shape index: {}]
  %s6 = inlined_call_operand.vmem [shape: f32[1024,128], index: 6, kind: output, shape index: {}]
  %s7 = sld [smem:[#allocation0]]
  $region57: #{quantile_model_forward.1} parent=0
    _
  %s9 = ssub.s32 1, %s7
  %s10 = scalar_select 0, %s9, %s7
  loop: start=0, step=1, limit=4
  $region2: #{quantile_model_forward.1} parent=0 // loop_pre_header
    _
  $region3: #{quantile_model_forward.1} parent=0 // loop_header
    %s12 = sphi 0, %s16
    %p13 = scmp.ge.s32.totalorder %s12, 4
    %s22 = sphi 0, %s24
    %s25 = sphi 0, %s22
    %s26 = sphi 0, %s25
    %s42 = sphi 0, %s26
    %s48 = sphi 0, %s50
    %s51 = sphi 0, %s48
    %s52 = sphi 0, %s51
    %s68 = sphi 0, %s52
    %s72 = sphi 0, %s72
    %s74 = sphi 0, %s72
    %s75 = sphi 0, %s74
    %s89 = sphi 0, %s75
    %s93 = sphi 0, %s93
    %s95 = sphi 0, %s93
    %s96 = sphi 0, %s95
    %s110 = sphi 0, %s96
    %s114 = sphi 0, %s114
    %s116 = sphi 0, %s114
    %s117 = sphi 0, %s116
    %s131 = sphi 0, %s117
    %s135 = sphi 0, %s135
    %s137 = sphi 0, %s135
    %s138 = sphi 0, %s137
    %s152 = sphi 0, %s138
    %s158 = sphi 0, %s160
    %s161 = sphi 0, %s158
    %s162 = sphi 0, %s161
    %s178 = sphi 0, %s162
  $region4: #{quantile_model_forward.1} parent=0 // loop_header_branch
    %15 = sbr.rel (%p13) target = $region8
  $region5: #{quantile_model_forward.1} parent=0 // loop_body
    %s17 = ssub.s32 %s12, 1
    %s18 = ssub.s32 %s12, 2
    %s19 = sadd.s32 %s12, 1
    %s20 = ssub.s32 %s12, %s19
    %p21 = scmp.eq.s32.totalorder %s20, 0
    %s23 = sadd.s32 %s22, 1
    %s24 = scalar_select %p21, %s22, %s23
    %p27 = pneg %p21
    %p28 = scmp.eq.s32.totalorder %s12, 1
    %p29 = por %p27, %p28
    %p30 = scmp.ne.s32.totalorder %s22, %s25
    %p31 = scmp.eq.s32.totalorder %s12, 0
    %p32 = por %p30, %p31
    %p33 = scmp.ne.s32.totalorder %s22, %s25
    %p34 = scmp.eq.s32.totalorder %s17, 1
    %p35 = por %p33, %p34
    %p36 = scmp.ne.s32.totalorder %s25, %s26
    %p37 = scmp.eq.s32.totalorder %s17, 0
    %p38 = por %p36, %p37
    %p39 = scmp.ne.s32.totalorder %s25, %s26
    %p40 = scmp.eq.s32.totalorder %s18, 1
    %p41 = por %p39, %p40
    %p43 = scmp.ne.s32.totalorder %s26, %s42
    %p44 = scmp.eq.s32.totalorder %s18, 0
    %p45 = por %p43, %p44
    %s46 = ssub.s32 %s12, %s19
    %p47 = scmp.eq.s32.totalorder %s46, 0
    %s49 = sadd.s32 %s48, 1
    %s50 = scalar_select %p47, %s48, %s49
    %p53 = pneg %p47
    %p54 = scmp.eq.s32.totalorder %s12, 1
    %p55 = por %p53, %p54
    %p56 = scmp.ne.s32.totalorder %s48, %s51
    %p57 = scmp.eq.s32.totalorder %s12, 0
    %p58 = por %p56, %p57
    %p59 = scmp.ne.s32.totalorder %s48, %s51
    %p60 = scmp.eq.s32.totalorder %s17, 1
    %p61 = por %p59, %p60
    %p62 = scmp.ne.s32.totalorder %s51, %s52
    %p63 = scmp.eq.s32.totalorder %s17, 0
    %p64 = por %p62, %p63
    %p65 = scmp.ne.s32.totalorder %s51, %s52
    %p66 = scmp.eq.s32.totalorder %s18, 1
    %p67 = por %p65, %p66
    %p69 = scmp.ne.s32.totalorder %s52, %s68
    %p70 = scmp.eq.s32.totalorder %s18, 0
    %p71 = por %p69, %p70
    %s73 = sadd.s32 %s72, 1
    %p76 = scmp.eq.s32.totalorder %s12, 1
    %p77 = scmp.ne.s32.totalorder %s72, %s74
    %p78 = scmp.eq.s32.totalorder %s12, 0
    %p79 = por %p77, %p78
    %p80 = scmp.ne.s32.totalorder %s72, %s74
    %p81 = scmp.eq.s32.totalorder %s17, 1
    %p82 = por %p80, %p81
    %p83 = scmp.ne.s32.totalorder %s74, %s75
    %p84 = scmp.eq.s32.totalorder %s17, 0
    %p85 = por %p83, %p84
    %p86 = scmp.ne.s32.totalorder %s74, %s75
    %p87 = scmp.eq.s32.totalorder %s18, 1
    %p88 = por %p86, %p87
    %p90 = scmp.ne.s32.totalorder %s75, %s89
    %p91 = scmp.eq.s32.totalorder %s18, 0
    %p92 = por %p90, %p91
    %s94 = sadd.s32 %s93, 1
    %p97 = scmp.eq.s32.totalorder %s12, 1
    %p98 = scmp.ne.s32.totalorder %s93, %s95
    %p99 = scmp.eq.s32.totalorder %s12, 0
    %p100 = por %p98, %p99
    %p101 = scmp.ne.s32.totalorder %s93, %s95
    %p102 = scmp.eq.s32.totalorder %s17, 1
    %p103 = por %p101, %p102
    %p104 = scmp.ne.s32.totalorder %s95, %s96
    %p105 = scmp.eq.s32.totalorder %s17, 0
    %p106 = por %p104, %p105
    %p107 = scmp.ne.s32.totalorder %s95, %s96
    %p108 = scmp.eq.s32.totalorder %s18, 1
    %p109 = por %p107, %p108
    %p111 = scmp.ne.s32.totalorder %s96, %s110
    %p112 = scmp.eq.s32.totalorder %s18, 0
    %p113 = por %p111, %p112
    %s115 = sadd.s32 %s114, 1
    %p118 = scmp.eq.s32.totalorder %s12, 1
    %p119 = scmp.ne.s32.totalorder %s114, %s116
    %p120 = scmp.eq.s32.totalorder %s12, 0
    %p121 = por %p119, %p120
    %p122 = scmp.ne.s32.totalorder %s114, %s116
    %p123 = scmp.eq.s32.totalorder %s17, 1
    %p124 = por %p122, %p123
    %p125 = scmp.ne.s32.totalorder %s116, %s117
    %p126 = scmp.eq.s32.totalorder %s17, 0
    %p127 = por %p125, %p126
    %p128 = scmp.ne.s32.totalorder %s116, %s117
    %p129 = scmp.eq.s32.totalorder %s18, 1
    %p130 = por %p128, %p129
    %p132 = scmp.ne.s32.totalorder %s117, %s131
    %p133 = scmp.eq.s32.totalorder %s18, 0
    %p134 = por %p132, %p133
    %s136 = sadd.s32 %s135, 1
    %p139 = scmp.eq.s32.totalorder %s12, 1
    %p140 = scmp.ne.s32.totalorder %s135, %s137
    %p141 = scmp.eq.s32.totalorder %s12, 0
    %p142 = por %p140, %p141
    %p143 = scmp.ne.s32.totalorder %s135, %s137
    %p144 = scmp.eq.s32.totalorder %s17, 1
    %p145 = por %p143, %p144
    %p146 = scmp.ne.s32.totalorder %s137, %s138
    %p147 = scmp.eq.s32.totalorder %s17, 0
    %p148 = por %p146, %p147
    %p149 = scmp.ne.s32.totalorder %s137, %s138
    %p150 = scmp.eq.s32.totalorder %s18, 1
    %p151 = por %p149, %p150
    %p153 = scmp.ne.s32.totalorder %s138, %s152
    %p154 = scmp.eq.s32.totalorder %s18, 0
    %p155 = por %p153, %p154
    %s156 = ssub.s32 %s12, %s19
    %p157 = scmp.eq.s32.totalorder %s156, 0
    %s159 = sadd.s32 %s158, 1
    %s160 = scalar_select %p157, %s158, %s159
    %p163 = pneg %p157
    %p164 = scmp.eq.s32.totalorder %s12, 1
    %p165 = por %p163, %p164
    %p166 = scmp.ne.s32.totalorder %s158, %s161
    %p167 = scmp.eq.s32.totalorder %s12, 0
    %p168 = por %p166, %p167
    %p169 = scmp.ne.s32.totalorder %s158, %s161
    %p170 = scmp.eq.s32.totalorder %s17, 1
    %p171 = por %p169, %p170
    %p172 = scmp.ne.s32.totalorder %s161, %s162
    %p173 = scmp.eq.s32.totalorder %s17, 0
    %p174 = por %p172, %p173
    %p175 = scmp.ne.s32.totalorder %s161, %s162
    %p176 = scmp.eq.s32.totalorder %s18, 1
    %p177 = por %p175, %p176
    %p179 = scmp.ne.s32.totalorder %s162, %s178
    %p180 = scmp.eq.s32.totalorder %s18, 0
    %p181 = por %p179, %p180
    %p182 = scmp.le.s32.totalorder 1, %s12
    %p183 = scmp.lt.s32.totalorder %s12, 3
    %p184 = pnand %p182, %p183
    %p185 = pneg %p184
    // Predicated region
    $region9: #{quantile_model_forward.1} parent=5 // pred_check
      _
    $region10: #{quantile_model_forward.1} parent=5 // pred_check_branch
      %187 = sbr.rel (%p184) target = $region12
    $region11: #{quantile_model_forward.1} parent=5 // pred_region
      %s188 = ssub.s32 %s12, 1
      // Predicated region
      $region13: #{quantile_model_forward.1} parent=11 // pred_check
        %p189 = pneg %p85
      $region14: #{quantile_model_forward.1} parent=11 // pred_check_branch
        %191 = sbr.rel (%p189) target = $region16
      $region15: #{quantile_model_forward.1} parent=11 // pred_region
        _
      $region16: #{quantile_model_forward.1} parent=11 // pred_fallthru
        _
      // Predicated region
      $region17: #{quantile_model_forward.1} parent=11 // pred_check
        %p192 = pneg %p106
      $region18: #{quantile_model_forward.1} parent=11 // pred_check_branch
        %194 = sbr.rel (%p192) target = $region20
      $region19: #{quantile_model_forward.1} parent=11 // pred_region
        _
      $region20: #{quantile_model_forward.1} parent=11 // pred_fallthru
        _
      // Predicated region
      $region21: #{quantile_model_forward.1} parent=11 // pred_check
        %p195 = pneg %p127
      $region22: #{quantile_model_forward.1} parent=11 // pred_check_branch
        %197 = sbr.rel (%p195) target = $region24
      $region23: #{quantile_model_forward.1} parent=11 // pred_region
        _
      $region24: #{quantile_model_forward.1} parent=11 // pred_fallthru
        _
      // Predicated region
      $region25: #{quantile_model_forward.1} parent=11 // pred_check
        %p198 = pneg %p148
      $region26: #{quantile_model_forward.1} parent=11 // pred_check_branch
        %200 = sbr.rel (%p198) target = $region28
      $region27: #{quantile_model_forward.1} parent=11 // pred_region
        _
      $region28: #{quantile_model_forward.1} parent=11 // pred_fallthru
        _
    $region12: #{quantile_model_forward.1} parent=5 // pred_fallthru
      _
    %p201 = scmp.lt.s32.totalorder %s12, 2
    // Predicated region
    $region29: #{quantile_model_forward.1} parent=5 // pred_check
      %p202 = pneg %p201
    $region30: #{quantile_model_forward.1} parent=5 // pred_check_branch
      %204 = sbr.rel (%p202) target = $region32
    $region31: #{quantile_model_forward.1} parent=5 // pred_region
      // Predicated region
      $region33: #{quantile_model_forward.1} parent=31 // pred_check
        %p205 = pneg %p32
      $region34: #{quantile_model_forward.1} parent=31 // pred_check_branch
        %207 = sbr.rel (%p205) target = $region36
      $region35: #{quantile_model_forward.1} parent=31 // pred_region
        %s208 = smul.u32 64, %s12
        %p209 = scmp.lt.s32.totalorder %s208, 127
        %s210 = scalar_select %p209, %s208, 127
        %s211 = smul.addr %s210, 4
        %s212 = scalar_lea.vmem %s0, %s211
        %s213 = smul.u32 64, %s12
      $region36: #{quantile_model_forward.1} parent=31 // pred_fallthru
        _
      // Predicated region
      $region37: #{quantile_model_forward.1} parent=31 // pred_check
        %p214 = pneg %p58
      $region38: #{quantile_model_forward.1} parent=31 // pred_check_branch
        %216 = sbr.rel (%p214) target = $region40
      $region39: #{quantile_model_forward.1} parent=31 // pred_region
        %s217 = smul.u32 64, %s12
        %p218 = scmp.lt.s32.totalorder %s217, 127
        %s219 = scalar_select %p218, %s217, 127
        %s220 = smul.addr %s219, 8
        %s221 = scalar_lea.vmem %s1, %s220
        %s222 = smul.u32 64, %s12
      $region40: #{quantile_model_forward.1} parent=31 // pred_fallthru
        _
    $region32: #{quantile_model_forward.1} parent=5 // pred_fallthru
      _
    %p223 = scmp.le.s32.totalorder 1, %s12
    %p224 = scmp.lt.s32.totalorder %s12, 3
    %p225 = pnand %p223, %p224
    %p226 = pneg %p225
    // Predicated region
    $region41: #{quantile_model_forward.1} parent=5 // pred_check
      _
    $region42: #{quantile_model_forward.1} parent=5 // pred_check_branch
      %228 = sbr.rel (%p225) target = $region44
    $region43: #{quantile_model_forward.1} parent=5 // pred_region
      %s229 = ssub.s32 %s12, 1
      %s230 = smul.u32 64, %s17
      %p231 = scmp.lt.s32.totalorder %s230, 127
      %s232 = scalar_select %p231, %s230, 127
      %s233 = smul.addr %s232, 4
      %s234 = scalar_lea.vmem %s0, %s233
      %p235 = pneg %p38
      %p236 = pneg %p35
      %s237 = smul.u32 64, %s17
      %p238 = scmp.lt.s32.totalorder %s237, 127
      %s239 = scalar_select %p238, %s237, 127
      %s240 = smul.addr %s239, 8
      %s241 = scalar_lea.vmem %s1, %s240
      %p242 = pneg %p64
      %p243 = pneg %p61
      %p244 = pneg %p85
      %p245 = pneg %p82
      %p246 = pneg %p106
      %p247 = pneg %p103
      %p248 = pneg %p127
      %p249 = pneg %p124
      %p250 = pneg %p148
      %p251 = pneg %p145
      %p252 = pneg %p174
      %p253 = pneg %p171
      %s254 = smul.u32 64, %s17
      %p255 = scmp.lt.s32.totalorder %s254, 127
      %s256 = scalar_select %p255, %s254, 127
      %s257 = smul.addr %s256, 8
      %s258 = scalar_lea.vmem %s6, %s257
      %s259 = smul.u32 64, %s17
      %p260 = scmp.lt.s32.totalorder %s259, 127
      %s261 = scalar_select %p260, %s259, 127
      %s262 = smul.addr %s261, 4
      %s263 = scalar_lea.vmem %s0, %s262
      %s264 = smul.u32 64, %s17
      %s265 = smul.u32 64, %s17
      %p266 = scmp.lt.s32.totalorder %s265, 127
      %s267 = scalar_select %p266, %s265, 127
      %s268 = smul.addr %s267, 8
      %s269 = scalar_lea.vmem %s1, %s268
      %s270 = smul.u32 64, %s17
      %s271 = smul.u32 64, %s17
      %p272 = scmp.lt.s32.totalorder %s271, 127
      %s273 = scalar_select %p272, %s271, 127
      %s274 = smul.addr %s273, 8
      %s275 = scalar_lea.vmem %s6, %s274
      %s276 = smul.u32 64, %s17
      %v278 = vld [vmem:[%s263] sm:$0xf]
      %v279 = vld [vmem:[%s263 + $0x4] sm:$0xf]
      %v280 = vld [vmem:[%s263 + $0x8] sm:$0xf]
      %v281 = vld [vmem:[%s263 + $0xc] sm:$0xf]
      %v282 = vld [vmem:[%s263 + $0x10] sm:$0xf]
      %v283 = vld [vmem:[%s263 + $0x14] sm:$0xf]
      %v284 = vld [vmem:[%s263 + $0x18] sm:$0xf]
      %v285 = vld [vmem:[%s263 + $0x1c] sm:$0xf]
      %v286 = vld [vmem:[%s263 + $0x20] sm:$0xf]
      %v287 = vld [vmem:[%s263 + $0x24] sm:$0xf]
      %v288 = vld [vmem:[%s263 + $0x28] sm:$0xf]
      %v289 = vld [vmem:[%s263 + $0x2c] sm:$0xf]
      %v290 = vld [vmem:[%s263 + $0x30] sm:$0xf]
      %v291 = vld [vmem:[%s263 + $0x34] sm:$0xf]
      %v292 = vld [vmem:[%s263 + $0x38] sm:$0xf]
      %v293 = vld [vmem:[%s263 + $0x3c] sm:$0xf]
      %v294 = vld [vmem:[%s263 + $0x40] sm:$0xf]
      %v295 = vld [vmem:[%s263 + $0x44] sm:$0xf]
      %v296 = vld [vmem:[%s263 + $0x48] sm:$0xf]
      %v297 = vld [vmem:[%s263 + $0x4c] sm:$0xf]
      %v298 = vld [vmem:[%s263 + $0x50] sm:$0xf]
      %v299 = vld [vmem:[%s263 + $0x54] sm:$0xf]
      %v300 = vld [vmem:[%s263 + $0x58] sm:$0xf]
      %v301 = vld [vmem:[%s263 + $0x5c] sm:$0xf]
      %v302 = vld [vmem:[%s263 + $0x60] sm:$0xf]
      %v303 = vld [vmem:[%s263 + $0x64] sm:$0xf]
      %v304 = vld [vmem:[%s263 + $0x68] sm:$0xf]
      %v305 = vld [vmem:[%s263 + $0x6c] sm:$0xf]
      %v306 = vld [vmem:[%s263 + $0x70] sm:$0xf]
      %v307 = vld [vmem:[%s263 + $0x74] sm:$0xf]
      %v308 = vld [vmem:[%s263 + $0x78] sm:$0xf]
      %v309 = vld [vmem:[%s263 + $0x7c] sm:$0xf]
      %v310 = vld [vmem:[%s263 + $0x80] sm:$0xf]
      %v311 = vld [vmem:[%s263 + $0x84] sm:$0xf]
      %v312 = vld [vmem:[%s263 + $0x88] sm:$0xf]
      %v313 = vld [vmem:[%s263 + $0x8c] sm:$0xf]
      %v314 = vld [vmem:[%s263 + $0x90] sm:$0xf]
      %v315 = vld [vmem:[%s263 + $0x94] sm:$0xf]
      %v316 = vld [vmem:[%s263 + $0x98] sm:$0xf]
      %v317 = vld [vmem:[%s263 + $0x9c] sm:$0xf]
      %v318 = vld [vmem:[%s263 + $0xa0] sm:$0xf]
      %v319 = vld [vmem:[%s263 + $0xa4] sm:$0xf]
      %v320 = vld [vmem:[%s263 + $0xa8] sm:$0xf]
      %v321 = vld [vmem:[%s263 + $0xac] sm:$0xf]
      %v322 = vld [vmem:[%s263 + $0xb0] sm:$0xf]
      %v323 = vld [vmem:[%s263 + $0xb4] sm:$0xf]
      %v324 = vld [vmem:[%s263 + $0xb8] sm:$0xf]
      %v325 = vld [vmem:[%s263 + $0xbc] sm:$0xf]
      %v326 = vld [vmem:[%s263 + $0xc0] sm:$0xf]
      %v327 = vld [vmem:[%s263 + $0xc4] sm:$0xf]
      %v328 = vld [vmem:[%s263 + $0xc8] sm:$0xf]
      %v329 = vld [vmem:[%s263 + $0xcc] sm:$0xf]
      %v330 = vld [vmem:[%s263 + $0xd0] sm:$0xf]
      %v331 = vld [vmem:[%s263 + $0xd4] sm:$0xf]
      %v332 = vld [vmem:[%s263 + $0xd8] sm:$0xf]
      %v333 = vld [vmem:[%s263 + $0xdc] sm:$0xf]
      %v334 = vld [vmem:[%s263 + $0xe0] sm:$0xf]
      %v335 = vld [vmem:[%s263 + $0xe4] sm:$0xf]
      %v336 = vld [vmem:[%s263 + $0xe8] sm:$0xf]
      %v337 = vld [vmem:[%s263 + $0xec] sm:$0xf]
      %v338 = vld [vmem:[%s263 + $0xf0] sm:$0xf]
      %v339 = vld [vmem:[%s263 + $0xf4] sm:$0xf]
      %v340 = vld [vmem:[%s263 + $0xf8] sm:$0xf]
      %v341 = vld [vmem:[%s263 + $0xfc] sm:$0xf]
      %v342 = vld [vmem:[%s2] sm:$0xf]
      %v343 = vld [vmem:[%s2 + $0x4] sm:$0xf]
      %v344 = vld [vmem:[%s2 + $0x8] sm:$0xf]
      %v345 = vld [vmem:[%s2 + $0xc] sm:$0xf]
      %v346 = vld [vmem:[%s3] sm:$0x1]
      %v348 = vlaneseq
      %v349 = vshrl.u32 %v348, 7
      %v350 = vsub.s32 0, %v349
      %v351 = vrot.slane %v346, %v350
      %v417 = vunpack.c.l.b16 %v278
      %v418 = vunpack.c.l.b16 %v279
      %v419 = vunpack.c.l.b16 %v280
      %v420 = vunpack.c.l.b16 %v281
      %v421 = vunpack.c.l.b16 %v282
      %v422 = vunpack.c.l.b16 %v283
      %v423 = vunpack.c.l.b16 %v284
      %v424 = vunpack.c.l.b16 %v285
      %v425 = vunpack.c.l.b16 %v286
      %v426 = vunpack.c.l.b16 %v287
      %v427 = vunpack.c.l.b16 %v288
      %v428 = vunpack.c.l.b16 %v289
      %v429 = vunpack.c.l.b16 %v290
      %v430 = vunpack.c.l.b16 %v291
      %v431 = vunpack.c.l.b16 %v292
      %v432 = vunpack.c.l.b16 %v293
      %v433 = vunpack.c.l.b16 %v294
      %v434 = vunpack.c.l.b16 %v295
      %v435 = vunpack.c.l.b16 %v296
      %v436 = vunpack.c.l.b16 %v297
      %v437 = vunpack.c.l.b16 %v298
      %v438 = vunpack.c.l.b16 %v299
      %v439 = vunpack.c.l.b16 %v300
      %v440 = vunpack.c.l.b16 %v301
      %v441 = vunpack.c.l.b16 %v302
      %v442 = vunpack.c.l.b16 %v303
      %v443 = vunpack.c.l.b16 %v304
      %v444 = vunpack.c.l.b16 %v305
      %v445 = vunpack.c.l.b16 %v306
      %v446 = vunpack.c.l.b16 %v307
      %v447 = vunpack.c.l.b16 %v308
      %v448 = vunpack.c.l.b16 %v309
      %v449 = vunpack.c.l.b16 %v310
      %v450 = vunpack.c.l.b16 %v311
      %v451 = vunpack.c.l.b16 %v312
      %v452 = vunpack.c.l.b16 %v313
      %v453 = vunpack.c.l.b16 %v314
      %v454 = vunpack.c.l.b16 %v315
      %v455 = vunpack.c.l.b16 %v316
      %v456 = vunpack.c.l.b16 %v317
      %v457 = vunpack.c.l.b16 %v318
      %v458 = vunpack.c.l.b16 %v319
      %v459 = vunpack.c.l.b16 %v320
      %v460 = vunpack.c.l.b16 %v321
      %v461 = vunpack.c.l.b16 %v322
      %v462 = vunpack.c.l.b16 %v323
      %v463 = vunpack.c.l.b16 %v324
      %v464 = vunpack.c.l.b16 %v325
      %v465 = vunpack.c.l.b16 %v326
      %v466 = vunpack.c.l.b16 %v327
      %v467 = vunpack.c.l.b16 %v328
      %v468 = vunpack.c.l.b16 %v329
      %v469 = vunpack.c.l.b16 %v330
      %v470 = vunpack.c.l.b16 %v331
      %v471 = vunpack.c.l.b16 %v332
      %v472 = vunpack.c.l.b16 %v333
      %v473 = vunpack.c.l.b16 %v334
      %v474 = vunpack.c.l.b16 %v335
      %v475 = vunpack.c.l.b16 %v336
      %v476 = vunpack.c.l.b16 %v337
      %v477 = vunpack.c.l.b16 %v338
      %v478 = vunpack.c.l.b16 %v339
      %v479 = vunpack.c.l.b16 %v340
      %v480 = vunpack.c.l.b16 %v341
      %v481 = vpack.c.b16 %v418, %v417
      %v482 = vpack.c.b16 %v420, %v419
      %v483 = vpack.c.b16 %v422, %v421
      %v484 = vpack.c.b16 %v424, %v423
      %v485 = vpack.c.b16 %v426, %v425
      %v486 = vpack.c.b16 %v428, %v427
      %v487 = vpack.c.b16 %v430, %v429
      %v488 = vpack.c.b16 %v432, %v431
      %v489 = vpack.c.b16 %v434, %v433
      %v490 = vpack.c.b16 %v436, %v435
      %v491 = vpack.c.b16 %v438, %v437
      %v492 = vpack.c.b16 %v440, %v439
      %v493 = vpack.c.b16 %v442, %v441
      %v494 = vpack.c.b16 %v444, %v443
      %v495 = vpack.c.b16 %v446, %v445
      %v496 = vpack.c.b16 %v448, %v447
      %v497 = vpack.c.b16 %v450, %v449
      %v498 = vpack.c.b16 %v452, %v451
      %v499 = vpack.c.b16 %v454, %v453
      %v500 = vpack.c.b16 %v456, %v455
      %v501 = vpack.c.b16 %v458, %v457
      %v502 = vpack.c.b16 %v460, %v459
      %v503 = vpack.c.b16 %v462, %v461
      %v504 = vpack.c.b16 %v464, %v463
      %v505 = vpack.c.b16 %v466, %v465
      %v506 = vpack.c.b16 %v468, %v467
      %v507 = vpack.c.b16 %v470, %v469
      %v508 = vpack.c.b16 %v472, %v471
      %v509 = vpack.c.b16 %v474, %v473
      %v510 = vpack.c.b16 %v476, %v475
      %v511 = vpack.c.b16 %v478, %v477
      %v512 = vpack.c.b16 %v480, %v479
      %v517 = vunpack.c.l.b16 %v342
      %v518 = vunpack.c.l.b16 %v343
      %v519 = vunpack.c.l.b16 %v344
      %v520 = vunpack.c.l.b16 %v345
      %v521 = vpack.c.b16 %v518, %v517
      %v522 = vpack.c.b16 %v520, %v519
      %vm525 = vcmask 261120
      %v527 = vsel %vm525, %v481, 0
      %v530 = vsel %vm525, %v482, 0
      %v533 = vsel %vm525, %v483, 0
      %v536 = vsel %vm525, %v484, 0
      %v539 = vsel %vm525, %v485, 0
      %v542 = vsel %vm525, %v486, 0
      %v545 = vsel %vm525, %v487, 0
      %v548 = vsel %vm525, %v488, 0
      %v551 = vsel %vm525, %v489, 0
      %v554 = vsel %vm525, %v490, 0
      %v557 = vsel %vm525, %v491, 0
      %v560 = vsel %vm525, %v492, 0
      %v563 = vsel %vm525, %v493, 0
      %v566 = vsel %vm525, %v494, 0
      %v569 = vsel %vm525, %v495, 0
      %v572 = vsel %vm525, %v496, 0
      %v575 = vsel %vm525, %v497, 0
      %v578 = vsel %vm525, %v498, 0
      %v581 = vsel %vm525, %v499, 0
      %v584 = vsel %vm525, %v500, 0
      %v587 = vsel %vm525, %v501, 0
      %v590 = vsel %vm525, %v502, 0
      %v593 = vsel %vm525, %v503, 0
      %v596 = vsel %vm525, %v504, 0
      %v599 = vsel %vm525, %v505, 0
      %v602 = vsel %vm525, %v506, 0
      %v605 = vsel %vm525, %v507, 0
      %v608 = vsel %vm525, %v508, 0
      %v611 = vsel %vm525, %v509, 0
      %v614 = vsel %vm525, %v510, 0
      %v617 = vsel %vm525, %v511, 0
      %v620 = vsel %vm525, %v512, 0
      %622 = vmatprep.subr.bf16.mxu0 0
      %623 = vmatpush1.bf16.msra.mxu0 %v521
      %624 = vmatprep.subr.bf16.mxu0 0
      %625 = vmatpush1.bf16.msra.mxu0 %v522
      %626 = vmatprep.subr.bf16.mxu0 0
      %627 = vmatpush1.bf16.msra.mxu0 0
      %628 = vmatprep.subr.bf16.mxu0 0
      %629 = vmatpush1.bf16.msra.mxu0 0
      %630 = vmatprep.subr.bf16.mxu0 0
      %631 = vmatpush1.bf16.msra.mxu0 0
      %632 = vmatprep.subr.bf16.mxu0 0
      %633 = vmatpush1.bf16.msra.mxu0 0
      %634 = vmatprep.subr.bf16.mxu0 0
      %635 = vmatpush1.bf16.msra.mxu0 0
      %636 = vmatprep.subr.bf16.mxu0 0
      %637 = vmatpush1.bf16.msra.mxu0 0
      %638 = vmatprep.subr.bf16.mxu0 0
      %639 = vmatpush1.bf16.msra.mxu0 0
      %640 = vmatprep.subr.bf16.mxu0 0
      %641 = vmatpush1.bf16.msra.mxu0 0
      %642 = vmatprep.subr.bf16.mxu0 0
      %643 = vmatpush1.bf16.msra.mxu0 0
      %644 = vmatprep.subr.bf16.mxu0 0
      %645 = vmatpush1.bf16.msra.mxu0 0
      %646 = vmatprep.subr.bf16.mxu0 0
      %647 = vmatpush1.bf16.msra.mxu0 0
      %648 = vmatprep.subr.bf16.mxu0 0
      %649 = vmatpush1.bf16.msra.mxu0 0
      %650 = vmatprep.subr.bf16.mxu0 0
      %651 = vmatpush1.bf16.msra.mxu0 0
      %652 = vmatprep.subr.bf16.mxu0 0
      %653 = vmatpush1.bf16.msra.mxu0 0
      %654 = vmatprep.mubr.bf16.mxu0 0
      %655 = vmatmul.mubr.bf16.gmra.mrb[0].mxu0 %v527
      %v656 = vpop.f32.mrb[0].mxu0
      %v657 = vadd.f32 %v351, %v656
      %v658 = vpop.f32.mrb[0].mxu0
      %v659 = vpop.f32.mrb[0].mxu0
      %v660 = vadd.f32 %v351, %v659
      %v661 = vpop.f32.mrb[0].mxu0
      %662 = vmatprep.mubr.bf16.mxu0 0
      %663 = vmatmul.mubr.bf16.gmra.mrb[0].mxu0 %v530
      %v664 = vpop.f32.mrb[0].mxu0
      %v665 = vadd.f32 %v351, %v664
      %v666 = vpop.f32.mrb[0].mxu0
      %v667 = vpop.f32.mrb[0].mxu0
      %v668 = vadd.f32 %v351, %v667
      %v669 = vpop.f32.mrb[0].mxu0
      %670 = vmatprep.mubr.bf16.mxu0 0
      %671 = vmatmul.mubr.bf16.gmra.mrb[0].mxu0 %v533
      %v672 = vpop.f32.mrb[0].mxu0
      %v673 = vadd.f32 %v351, %v672
      %v674 = vpop.f32.mrb[0].mxu0
      %v675 = vpop.f32.mrb[0].mxu0
      %v676 = vadd.f32 %v351, %v675
      %v677 = vpop.f32.mrb[0].mxu0
      %678 = vmatprep.mubr.bf16.mxu0 0
      %679 = vmatmul.mubr.bf16.gmra.mrb[0].mxu0 %v536
      %v680 = vpop.f32.mrb[0].mxu0
      %v681 = vadd.f32 %v351, %v680
      %v682 = vpop.f32.mrb[0].mxu0
      %v683 = vpop.f32.mrb[0].mxu0
      %v684 = vadd.f32 %v351, %v683
      %v685 = vpop.f32.mrb[0].mxu0
      %686 = vmatprep.mubr.bf16.mxu0 0
      %687 = vmatmul.mubr.bf16.gmra.mrb[0].mxu0 %v539
      %v688 = vpop.f32.mrb[0].mxu0
      %v689 = vadd.f32 %v351, %v688
      %v690 = vpop.f32.mrb[0].mxu0
      %v691 = vpop.f32.mrb[0].mxu0
      %v692 = vadd.f32 %v351, %v691
      %v693 = vpop.f32.mrb[0].mxu0
      %694 = vmatprep.mubr.bf16.mxu0 0
      %695 = vmatmul.mubr.bf16.gmra.mrb[0].mxu0 %v542
      %v696 = vpop.f32.mrb[0].mxu0
      %v697 = vadd.f32 %v351, %v696
      %v698 = vpop.f32.mrb[0].mxu0
      %v699 = vpop.f32.mrb[0].mxu0
      %v700 = vadd.f32 %v351, %v699
      %v701 = vpop.f32.mrb[0].mxu0
      %702 = vmatprep.mubr.bf16.mxu0 0
      %703 = vmatmul.mubr.bf16.gmra.mrb[0].mxu0 %v545
      %v704 = vpop.f32.mrb[0].mxu0
      %v705 = vadd.f32 %v351, %v704
      %v706 = vpop.f32.mrb[0].mxu0
      %v707 = vpop.f32.mrb[0].mxu0
      %v708 = vadd.f32 %v351, %v707
      %v709 = vpop.f32.mrb[0].mxu0
      %710 = vmatprep.mubr.bf16.mxu0 0
      %711 = vmatmul.mubr.bf16.gmra.mrb[0].mxu0 %v548
      %v712 = vpop.f32.mrb[0].mxu0
      %v713 = vadd.f32 %v351, %v712
      %v714 = vpop.f32.mrb[0].mxu0
      %v715 = vpop.f32.mrb[0].mxu0
      %v716 = vadd.f32 %v351, %v715
      %v717 = vpop.f32.mrb[0].mxu0
      %718 = vmatprep.mubr.bf16.mxu0 0
      %719 = vmatmul.mubr.bf16.gmra.mrb[0].mxu0 %v551
      %v720 = vpop.f32.mrb[0].mxu0
      %v721 = vadd.f32 %v351, %v720
      %v722 = vpop.f32.mrb[0].mxu0
      %v723 = vpop.f32.mrb[0].mxu0
      %v724 = vadd.f32 %v351, %v723
      %v725 = vpop.f32.mrb[0].mxu0
      %726 = vmatprep.mubr.bf16.mxu0 0
      %727 = vmatmul.mubr.bf16.gmra.mrb[0].mxu0 %v554
      %v728 = vpop.f32.mrb[0].mxu0
      %v729 = vadd.f32 %v351, %v728
      %v730 = vpop.f32.mrb[0].mxu0
      %v731 = vpop.f32.mrb[0].mxu0
      %v732 = vadd.f32 %v351, %v731
      %v733 = vpop.f32.mrb[0].mxu0
      %734 = vmatprep.mubr.bf16.mxu0 0
      %735 = vmatmul.mubr.bf16.gmra.mrb[0].mxu0 %v557
      %v736 = vpop.f32.mrb[0].mxu0
      %v737 = vadd.f32 %v351, %v736
      %v738 = vpop.f32.mrb[0].mxu0
      %v739 = vpop.f32.mrb[0].mxu0
      %v740 = vadd.f32 %v351, %v739
      %v741 = vpop.f32.mrb[0].mxu0
      %742 = vmatprep.mubr.bf16.mxu0 0
      %743 = vmatmul.mubr.bf16.gmra.mrb[0].mxu0 %v560
      %v744 = vpop.f32.mrb[0].mxu0
      %v745 = vadd.f32 %v351, %v744
      %v746 = vpop.f32.mrb[0].mxu0
      %v747 = vpop.f32.mrb[0].mxu0
      %v748 = vadd.f32 %v351, %v747
      %v749 = vpop.f32.mrb[0].mxu0
      %750 = vmatprep.mubr.bf16.mxu0 0
      %751 = vmatmul.mubr.bf16.gmra.mrb[0].mxu0 %v563
      %v752 = vpop.f32.mrb[0].mxu0
      %v753 = vadd.f32 %v351, %v752
      %v754 = vpop.f32.mrb[0].mxu0
      %v755 = vpop.f32.mrb[0].mxu0
      %v756 = vadd.f32 %v351, %v755
      %v757 = vpop.f32.mrb[0].mxu0
      %758 = vmatprep.mubr.bf16.mxu0 0
      %759 = vmatmul.mubr.bf16.gmra.mrb[0].mxu0 %v566
      %v760 = vpop.f32.mrb[0].mxu0
      %v761 = vadd.f32 %v351, %v760
      %v762 = vpop.f32.mrb[0].mxu0
      %v763 = vpop.f32.mrb[0].mxu0
      %v764 = vadd.f32 %v351, %v763
      %v765 = vpop.f32.mrb[0].mxu0
      %766 = vmatprep.mubr.bf16.mxu0 0
      %767 = vmatmul.mubr.bf16.gmra.mrb[0].mxu0 %v569
      %v768 = vpop.f32.mrb[0].mxu0
      %v769 = vadd.f32 %v351, %v768
      %v770 = vpop.f32.mrb[0].mxu0
      %v771 = vpop.f32.mrb[0].mxu0
      %v772 = vadd.f32 %v351, %v771
      %v773 = vpop.f32.mrb[0].mxu0
      %774 = vmatprep.mubr.bf16.mxu0 0
      %775 = vmatmul.mubr.bf16.gmra.mrb[0].mxu0 %v572
      %v776 = vpop.f32.mrb[0].mxu0
      %v777 = vadd.f32 %v351, %v776
      %v778 = vpop.f32.mrb[0].mxu0
      %v779 = vpop.f32.mrb[0].mxu0
      %v780 = vadd.f32 %v351, %v779
      %v781 = vpop.f32.mrb[0].mxu0
      %782 = vmatprep.mubr.bf16.mxu0 0
      %783 = vmatmul.mubr.bf16.gmra.mrb[0].mxu0 %v575
      %v784 = vpop.f32.mrb[0].mxu0
      %v785 = vadd.f32 %v351, %v784
      %v786 = vpop.f32.mrb[0].mxu0
      %v787 = vpop.f32.mrb[0].mxu0
      %v788 = vadd.f32 %v351, %v787
      %v789 = vpop.f32.mrb[0].mxu0
      %790 = vmatprep.mubr.bf16.mxu0 0
      %791 = vmatmul.mubr.bf16.gmra.mrb[0].mxu0 %v578
      %v792 = vpop.f32.mrb[0].mxu0
      %v793 = vadd.f32 %v351, %v792
      %v794 = vpop.f32.mrb[0].mxu0
      %v795 = vpop.f32.mrb[0].mxu0
      %v796 = vadd.f32 %v351, %v795
      %v797 = vpop.f32.mrb[0].mxu0
      %798 = vmatprep.mubr.bf16.mxu0 0
      %799 = vmatmul.mubr.bf16.gmra.mrb[0].mxu0 %v581
      %v800 = vpop.f32.mrb[0].mxu0
      %v801 = vadd.f32 %v351, %v800
      %v802 = vpop.f32.mrb[0].mxu0
      %v803 = vpop.f32.mrb[0].mxu0
      %v804 = vadd.f32 %v351, %v803
      %v805 = vpop.f32.mrb[0].mxu0
      %806 = vmatprep.mubr.bf16.mxu0 0
      %807 = vmatmul.mubr.bf16.gmra.mrb[0].mxu0 %v584
      %v808 = vpop.f32.mrb[0].mxu0
      %v809 = vadd.f32 %v351, %v808
      %v810 = vpop.f32.mrb[0].mxu0
      %v811 = vpop.f32.mrb[0].mxu0
      %v812 = vadd.f32 %v351, %v811
      %v813 = vpop.f32.mrb[0].mxu0
      %814 = vmatprep.mubr.bf16.mxu0 0
      %815 = vmatmul.mubr.bf16.gmra.mrb[0].mxu0 %v587
      %v816 = vpop.f32.mrb[0].mxu0
      %v817 = vadd.f32 %v351, %v816
      %v818 = vpop.f32.mrb[0].mxu0
      %v819 = vpop.f32.mrb[0].mxu0
      %v820 = vadd.f32 %v351, %v819
      %v821 = vpop.f32.mrb[0].mxu0
      %822 = vmatprep.mubr.bf16.mxu0 0
      %823 = vmatmul.mubr.bf16.gmra.mrb[0].mxu0 %v590
      %v824 = vpop.f32.mrb[0].mxu0
      %v825 = vadd.f32 %v351, %v824
      %v826 = vpop.f32.mrb[0].mxu0
      %v827 = vpop.f32.mrb[0].mxu0
      %v828 = vadd.f32 %v351, %v827
      %v829 = vpop.f32.mrb[0].mxu0
      %830 = vmatprep.mubr.bf16.mxu0 0
      %831 = vmatmul.mubr.bf16.gmra.mrb[0].mxu0 %v593
      %v832 = vpop.f32.mrb[0].mxu0
      %v833 = vadd.f32 %v351, %v832
      %v834 = vpop.f32.mrb[0].mxu0
      %v835 = vpop.f32.mrb[0].mxu0
      %v836 = vadd.f32 %v351, %v835
      %v837 = vpop.f32.mrb[0].mxu0
      %838 = vmatprep.mubr.bf16.mxu0 0
      %839 = vmatmul.mubr.bf16.gmra.mrb[0].mxu0 %v596
      %v840 = vpop.f32.mrb[0].mxu0
      %v841 = vadd.f32 %v351, %v840
      %v842 = vpop.f32.mrb[0].mxu0
      %v843 = vpop.f32.mrb[0].mxu0
      %v844 = vadd.f32 %v351, %v843
      %v845 = vpop.f32.mrb[0].mxu0
      %846 = vmatprep.mubr.bf16.mxu0 0
      %847 = vmatmul.mubr.bf16.gmra.mrb[0].mxu0 %v599
      %v848 = vpop.f32.mrb[0].mxu0
      %v849 = vadd.f32 %v351, %v848
      %v850 = vpop.f32.mrb[0].mxu0
      %v851 = vpop.f32.mrb[0].mxu0
      %v852 = vadd.f32 %v351, %v851
      %v853 = vpop.f32.mrb[0].mxu0
      %854 = vmatprep.mubr.bf16.mxu0 0
      %855 = vmatmul.mubr.bf16.gmra.mrb[0].mxu0 %v602
      %v856 = vpop.f32.mrb[0].mxu0
      %v857 = vadd.f32 %v351, %v856
      %v858 = vpop.f32.mrb[0].mxu0
      %v859 = vpop.f32.mrb[0].mxu0
      %v860 = vadd.f32 %v351, %v859
      %v861 = vpop.f32.mrb[0].mxu0
      %862 = vmatprep.mubr.bf16.mxu0 0
      %863 = vmatmul.mubr.bf16.gmra.mrb[0].mxu0 %v605
      %v864 = vpop.f32.mrb[0].mxu0
      %v865 = vadd.f32 %v351, %v864
      %v866 = vpop.f32.mrb[0].mxu0
      %v867 = vpop.f32.mrb[0].mxu0
      %v868 = vadd.f32 %v351, %v867
      %v869 = vpop.f32.mrb[0].mxu0
      %870 = vmatprep.mubr.bf16.mxu0 0
      %871 = vmatmul.mubr.bf16.gmra.mrb[0].mxu0 %v608
      %v872 = vpop.f32.mrb[0].mxu0
      %v873 = vadd.f32 %v351, %v872
      %v874 = vpop.f32.mrb[0].mxu0
      %v875 = vpop.f32.mrb[0].mxu0
      %v876 = vadd.f32 %v351, %v875
      %v877 = vpop.f32.mrb[0].mxu0
      %878 = vmatprep.mubr.bf16.mxu0 0
      %879 = vmatmul.mubr.bf16.gmra.mrb[0].mxu0 %v611
      %v880 = vpop.f32.mrb[0].mxu0
      %v881 = vadd.f32 %v351, %v880
      %v882 = vpop.f32.mrb[0].mxu0
      %v883 = vpop.f32.mrb[0].mxu0
      %v884 = vadd.f32 %v351, %v883
      %v885 = vpop.f32.mrb[0].mxu0
      %886 = vmatprep.mubr.bf16.mxu0 0
      %887 = vmatmul.mubr.bf16.gmra.mrb[0].mxu0 %v614
      %v888 = vpop.f32.mrb[0].mxu0
      %v889 = vadd.f32 %v351, %v888
      %v890 = vpop.f32.mrb[0].mxu0
      %v891 = vpop.f32.mrb[0].mxu0
      %v892 = vadd.f32 %v351, %v891
      %v893 = vpop.f32.mrb[0].mxu0
      %894 = vmatprep.mubr.bf16.mxu0 0
      %895 = vmatmul.mubr.bf16.gmra.mrb[0].mxu0 %v617
      %v896 = vpop.f32.mrb[0].mxu0
      %v897 = vadd.f32 %v351, %v896
      %v898 = vpop.f32.mrb[0].mxu0
      %v899 = vpop.f32.mrb[0].mxu0
      %v900 = vadd.f32 %v351, %v899
      %v901 = vpop.f32.mrb[0].mxu0
      %902 = vmatprep.mubr.bf16.mxu0 0
      %903 = vmatmul.mubr.bf16.gmra.mrb[0].mxu0 %v620
      %v904 = vpop.f32.mrb[0].mxu0
      %v905 = vadd.f32 %v351, %v904
      %v906 = vpop.f32.mrb[0].mxu0
      %v907 = vpop.f32.mrb[0].mxu0
      %v908 = vadd.f32 %v351, %v907
      %v909 = vpop.f32.mrb[0].mxu0
      %910 = vdwg.mxu0
      %v911 = vxor.u32 %v657, 2147483648
      %v912 = vxor.u32 %v660, 2147483648
      %v913 = vxor.u32 %v665, 2147483648
      %v914 = vxor.u32 %v668, 2147483648
      %v915 = vxor.u32 %v673, 2147483648
      %v916 = vxor.u32 %v676, 2147483648
      %v917 = vxor.u32 %v681, 2147483648
      %v918 = vxor.u32 %v684, 2147483648
      %v919 = vxor.u32 %v689, 2147483648
      %v920 = vxor.u32 %v692, 2147483648
      %v921 = vxor.u32 %v697, 2147483648
      %v922 = vxor.u32 %v700, 2147483648
      %v923 = vxor.u32 %v705, 2147483648
      %v924 = vxor.u32 %v708, 2147483648
      %v925 = vxor.u32 %v713, 2147483648
      %v926 = vxor.u32 %v716, 2147483648
      %v927 = vxor.u32 %v721, 2147483648
      %v928 = vxor.u32 %v724, 2147483648
      %v929 = vxor.u32 %v729, 2147483648
      %v930 = vxor.u32 %v732, 2147483648
      %v931 = vxor.u32 %v737, 2147483648
      %v932 = vxor.u32 %v740, 2147483648
      %v933 = vxor.u32 %v745, 2147483648
      %v934 = vxor.u32 %v748, 2147483648
      %v935 = vxor.u32 %v753, 2147483648
      %v936 = vxor.u32 %v756, 2147483648
      %v937 = vxor.u32 %v761, 2147483648
      %v938 = vxor.u32 %v764, 2147483648
      %v939 = vxor.u32 %v769, 2147483648
      %v940 = vxor.u32 %v772, 2147483648
      %v941 = vxor.u32 %v777, 2147483648
      %v942 = vxor.u32 %v780, 2147483648
      %v943 = vxor.u32 %v785, 2147483648
      %v944 = vxor.u32 %v788, 2147483648
      %v945 = vxor.u32 %v793, 2147483648
      %v946 = vxor.u32 %v796, 2147483648
      %v947 = vxor.u32 %v801, 2147483648
      %v948 = vxor.u32 %v804, 2147483648
      %v949 = vxor.u32 %v809, 2147483648
      %v950 = vxor.u32 %v812, 2147483648
      %v951 = vxor.u32 %v817, 2147483648
      %v952 = vxor.u32 %v820, 2147483648
      %v953 = vxor.u32 %v825, 2147483648
      %v954 = vxor.u32 %v828, 2147483648
      %v955 = vxor.u32 %v833, 2147483648
      %v956 = vxor.u32 %v836, 2147483648
      %v957 = vxor.u32 %v841, 2147483648
      %v958 = vxor.u32 %v844, 2147483648
      %v959 = vxor.u32 %v849, 2147483648
      %v960 = vxor.u32 %v852, 2147483648
      %v961 = vxor.u32 %v857, 2147483648
      %v962 = vxor.u32 %v860, 2147483648
      %v963 = vxor.u32 %v865, 2147483648
      %v964 = vxor.u32 %v868, 2147483648
      %v965 = vxor.u32 %v873, 2147483648
      %v966 = vxor.u32 %v876, 2147483648
      %v967 = vxor.u32 %v881, 2147483648
      %v968 = vxor.u32 %v884, 2147483648
      %v969 = vxor.u32 %v889, 2147483648
      %v970 = vxor.u32 %v892, 2147483648
      %v971 = vxor.u32 %v897, 2147483648
      %v972 = vxor.u32 %v900, 2147483648
      %v973 = vxor.u32 %v905, 2147483648
      %v974 = vxor.u32 %v908, 2147483648
      %v975 = vmul.f32 %v911, 1.442695
      %v976 = vpow.pop %v975
      %v977 = vmul.f32 %v912, 1.442695
      %v978 = vpow.pop %v977
      %v979 = vmul.f32 %v913, 1.442695
      %v980 = vpow.pop %v979
      %v981 = vmul.f32 %v914, 1.442695
      %v982 = vpow.pop %v981
      %v983 = vmul.f32 %v915, 1.442695
      %v984 = vpow.pop %v983
      %v985 = vmul.f32 %v916, 1.442695
      %v986 = vpow.pop %v985
      %v987 = vmul.f32 %v917, 1.442695
      %v988 = vpow.pop %v987
      %v989 = vmul.f32 %v918, 1.442695
      %v990 = vpow.pop %v989
      %v991 = vmul.f32 %v919, 1.442695
      %v992 = vpow.pop %v991
      %v993 = vmul.f32 %v920, 1.442695
      %v994 = vpow.pop %v993
      %v995 = vmul.f32 %v921, 1.442695
      %v996 = vpow.pop %v995
      %v997 = vmul.f32 %v922, 1.442695
      %v998 = vpow.pop %v997
      %v999 = vmul.f32 %v923, 1.442695
      %v1000 = vpow.pop %v999
      %v1001 = vmul.f32 %v924, 1.442695
      %v1002 = vpow.pop %v1001
      %v1003 = vmul.f32 %v925, 1.442695
      %v1004 = vpow.pop %v1003
      %v1005 = vmul.f32 %v926, 1.442695
      %v1006 = vpow.pop %v1005
      %v1007 = vmul.f32 %v927, 1.442695
      %v1008 = vpow.pop %v1007
      %v1009 = vmul.f32 %v928, 1.442695
      %v1010 = vpow.pop %v1009
      %v1011 = vmul.f32 %v929, 1.442695
      %v1012 = vpow.pop %v1011
      %v1013 = vmul.f32 %v930, 1.442695
      %v1014 = vpow.pop %v1013
      %v1015 = vmul.f32 %v931, 1.442695
      %v1016 = vpow.pop %v1015
      %v1017 = vmul.f32 %v932, 1.442695
      %v1018 = vpow.pop %v1017
      %v1019 = vmul.f32 %v933, 1.442695
      %v1020 = vpow.pop %v1019
      %v1021 = vmul.f32 %v934, 1.442695
      %v1022 = vpow.pop %v1021
      %v1023 = vmul.f32 %v935, 1.442695
      %v1024 = vpow.pop %v1023
      %v1025 = vmul.f32 %v936, 1.442695
      %v1026 = vpow.pop %v1025
      %v1027 = vmul.f32 %v937, 1.442695
      %v1028 = vpow.pop %v1027
      %v1029 = vmul.f32 %v938, 1.442695
      %v1030 = vpow.pop %v1029
      %v1031 = vmul.f32 %v939, 1.442695
      %v1032 = vpow.pop %v1031
      %v1033 = vmul.f32 %v940, 1.442695
      %v1034 = vpow.pop %v1033
      %v1035 = vmul.f32 %v941, 1.442695
      %v1036 = vpow.pop %v1035
      %v1037 = vmul.f32 %v942, 1.442695
      %v1038 = vpow.pop %v1037
      %v1039 = vmul.f32 %v943, 1.442695
      %v1040 = vpow.pop %v1039
      %v1041 = vmul.f32 %v944, 1.442695
      %v1042 = vpow.pop %v1041
      %v1043 = vmul.f32 %v945, 1.442695
      %v1044 = vpow.pop %v1043
      %v1045 = vmul.f32 %v946, 1.442695
      %v1046 = vpow.pop %v1045
      %v1047 = vmul.f32 %v947, 1.442695
      %v1048 = vpow.pop %v1047
      %v1049 = vmul.f32 %v948, 1.442695
      %v1050 = vpow.pop %v1049
      %v1051 = vmul.f32 %v949, 1.442695
      %v1052 = vpow.pop %v1051
      %v1053 = vmul.f32 %v950, 1.442695
      %v1054 = vpow.pop %v1053
      %v1055 = vmul.f32 %v951, 1.442695
      %v1056 = vpow.pop %v1055
      %v1057 = vmul.f32 %v952, 1.442695
      %v1058 = vpow.pop %v1057
      %v1059 = vmul.f32 %v953, 1.442695
      %v1060 = vpow.pop %v1059
      %v1061 = vmul.f32 %v954, 1.442695
      %v1062 = vpow.pop %v1061
      %v1063 = vmul.f32 %v955, 1.442695
      %v1064 = vpow.pop %v1063
      %v1065 = vmul.f32 %v956, 1.442695
      %v1066 = vpow.pop %v1065
      %v1067 = vmul.f32 %v957, 1.442695
      %v1068 = vpow.pop %v1067
      %v1069 = vmul.f32 %v958, 1.442695
      %v1070 = vpow.pop %v1069
      %v1071 = vmul.f32 %v959, 1.442695
      %v1072 = vpow.pop %v1071
      %v1073 = vmul.f32 %v960, 1.442695
      %v1074 = vpow.pop %v1073
      %v1075 = vmul.f32 %v961, 1.442695
      %v1076 = vpow.pop %v1075
      %v1077 = vmul.f32 %v962, 1.442695
      %v1078 = vpow.pop %v1077
      %v1079 = vmul.f32 %v963, 1.442695
      %v1080 = vpow.pop %v1079
      %v1081 = vmul.f32 %v964, 1.442695
      %v1082 = vpow.pop %v1081
      %v1083 = vmul.f32 %v965, 1.442695
      %v1084 = vpow.pop %v1083
      %v1085 = vmul.f32 %v966, 1.442695
      %v1086 = vpow.pop %v1085
      %v1087 = vmul.f32 %v967, 1.442695
      %v1088 = vpow.pop %v1087
      %v1089 = vmul.f32 %v968, 1.442695
      %v1090 = vpow.pop %v1089
      %v1091 = vmul.f32 %v969, 1.442695
      %v1092 = vpow.pop %v1091
      %v1093 = vmul.f32 %v970, 1.442695
      %v1094 = vpow.pop %v1093
      %v1095 = vmul.f32 %v971, 1.442695
      %v1096 = vpow.pop %v1095
      %v1097 = vmul.f32 %v972, 1.442695
      %v1098 = vpow.pop %v1097
      %v1099 = vmul.f32 %v973, 1.442695
      %v1100 = vpow.pop %v1099
      %v1101 = vmul.f32 %v974, 1.442695
      %v1102 = vpow.pop %v1101
      %v1103 = vadd.f32 %v976, 1.0
      %v1104 = vadd.f32 %v978, 1.0
      %v1105 = vadd.f32 %v980, 1.0
      %v1106 = vadd.f32 %v982, 1.0
      %v1107 = vadd.f32 %v984, 1.0
      %v1108 = vadd.f32 %v986, 1.0
      %v1109 = vadd.f32 %v988, 1.0
      %v1110 = vadd.f32 %v990, 1.0
      %v1111 = vadd.f32 %v992, 1.0
      %v1112 = vadd.f32 %v994, 1.0
      %v1113 = vadd.f32 %v996, 1.0
      %v1114 = vadd.f32 %v998, 1.0
      %v1115 = vadd.f32 %v1000, 1.0
      %v1116 = vadd.f32 %v1002, 1.0
      %v1117 = vadd.f32 %v1004, 1.0
      %v1118 = vadd.f32 %v1006, 1.0
      %v1119 = vadd.f32 %v1008, 1.0
      %v1120 = vadd.f32 %v1010, 1.0
      %v1121 = vadd.f32 %v1012, 1.0
      %v1122 = vadd.f32 %v1014, 1.0
      %v1123 = vadd.f32 %v1016, 1.0
      %v1124 = vadd.f32 %v1018, 1.0
      %v1125 = vadd.f32 %v1020, 1.0
      %v1126 = vadd.f32 %v1022, 1.0
      %v1127 = vadd.f32 %v1024, 1.0
      %v1128 = vadd.f32 %v1026, 1.0
      %v1129 = vadd.f32 %v1028, 1.0
      %v1130 = vadd.f32 %v1030, 1.0
      %v1131 = vadd.f32 %v1032, 1.0
      %v1132 = vadd.f32 %v1034, 1.0
      %v1133 = vadd.f32 %v1036, 1.0
      %v1134 = vadd.f32 %v1038, 1.0
      %v1135 = vadd.f32 %v1040, 1.0
      %v1136 = vadd.f32 %v1042, 1.0
      %v1137 = vadd.f32 %v1044, 1.0
      %v1138 = vadd.f32 %v1046, 1.0
      %v1139 = vadd.f32 %v1048, 1.0
      %v1140 = vadd.f32 %v1050, 1.0
      %v1141 = vadd.f32 %v1052, 1.0
      %v1142 = vadd.f32 %v1054, 1.0
      %v1143 = vadd.f32 %v1056, 1.0
      %v1144 = vadd.f32 %v1058, 1.0
      %v1145 = vadd.f32 %v1060, 1.0
      %v1146 = vadd.f32 %v1062, 1.0
      %v1147 = vadd.f32 %v1064, 1.0
      %v1148 = vadd.f32 %v1066, 1.0
      %v1149 = vadd.f32 %v1068, 1.0
      %v1150 = vadd.f32 %v1070, 1.0
      %v1151 = vadd.f32 %v1072, 1.0
      %v1152 = vadd.f32 %v1074, 1.0
      %v1153 = vadd.f32 %v1076, 1.0
      %v1154 = vadd.f32 %v1078, 1.0
      %v1155 = vadd.f32 %v1080, 1.0
      %v1156 = vadd.f32 %v1082, 1.0
      %v1157 = vadd.f32 %v1084, 1.0
      %v1158 = vadd.f32 %v1086, 1.0
      %v1159 = vadd.f32 %v1088, 1.0
      %v1160 = vadd.f32 %v1090, 1.0
      %v1161 = vadd.f32 %v1092, 1.0
      %v1162 = vadd.f32 %v1094, 1.0
      %v1163 = vadd.f32 %v1096, 1.0
      %v1164 = vadd.f32 %v1098, 1.0
      %v1165 = vadd.f32 %v1100, 1.0
      %v1166 = vadd.f32 %v1102, 1.0
      %v1167 = vrcp.pop %v1103
      %v1168 = vmul.f32 1.0, %v1167
      %v1169 = vrcp.pop %v1104
      %v1170 = vmul.f32 1.0, %v1169
      %v1171 = vrcp.pop %v1105
      %v1172 = vmul.f32 1.0, %v1171
      %v1173 = vrcp.pop %v1106
      %v1174 = vmul.f32 1.0, %v1173
      %v1175 = vrcp.pop %v1107
      %v1176 = vmul.f32 1.0, %v1175
      %v1177 = vrcp.pop %v1108
      %v1178 = vmul.f32 1.0, %v1177
      %v1179 = vrcp.pop %v1109
      %v1180 = vmul.f32 1.0, %v1179
      %v1181 = vrcp.pop %v1110
      %v1182 = vmul.f32 1.0, %v1181
      %v1183 = vrcp.pop %v1111
      %v1184 = vmul.f32 1.0, %v1183
      %v1185 = vrcp.pop %v1112
      %v1186 = vmul.f32 1.0, %v1185
      %v1187 = vrcp.pop %v1113
      %v1188 = vmul.f32 1.0, %v1187
      %v1189 = vrcp.pop %v1114
      %v1190 = vmul.f32 1.0, %v1189
      %v1191 = vrcp.pop %v1115
      %v1192 = vmul.f32 1.0, %v1191
      %v1193 = vrcp.pop %v1116
      %v1194 = vmul.f32 1.0, %v1193
      %v1195 = vrcp.pop %v1117
      %v1196 = vmul.f32 1.0, %v1195
      %v1197 = vrcp.pop %v1118
      %v1198 = vmul.f32 1.0, %v1197
      %v1199 = vrcp.pop %v1119
      %v1200 = vmul.f32 1.0, %v1199
      %v1201 = vrcp.pop %v1120
      %v1202 = vmul.f32 1.0, %v1201
      %v1203 = vrcp.pop %v1121
      %v1204 = vmul.f32 1.0, %v1203
      %v1205 = vrcp.pop %v1122
      %v1206 = vmul.f32 1.0, %v1205
      %v1207 = vrcp.pop %v1123
      %v1208 = vmul.f32 1.0, %v1207
      %v1209 = vrcp.pop %v1124
      %v1210 = vmul.f32 1.0, %v1209
      %v1211 = vrcp.pop %v1125
      %v1212 = vmul.f32 1.0, %v1211
      %v1213 = vrcp.pop %v1126
      %v1214 = vmul.f32 1.0, %v1213
      %v1215 = vrcp.pop %v1127
      %v1216 = vmul.f32 1.0, %v1215
      %v1217 = vrcp.pop %v1128
      %v1218 = vmul.f32 1.0, %v1217
      %v1219 = vrcp.pop %v1129
      %v1220 = vmul.f32 1.0, %v1219
      %v1221 = vrcp.pop %v1130
      %v1222 = vmul.f32 1.0, %v1221
      %v1223 = vrcp.pop %v1131
      %v1224 = vmul.f32 1.0, %v1223
      %v1225 = vrcp.pop %v1132
      %v1226 = vmul.f32 1.0, %v1225
      %v1227 = vrcp.pop %v1133
      %v1228 = vmul.f32 1.0, %v1227
      %v1229 = vrcp.pop %v1134
      %v1230 = vmul.f32 1.0, %v1229
      %v1231 = vrcp.pop %v1135
      %v1232 = vmul.f32 1.0, %v1231
      %v1233 = vrcp.pop %v1136
      %v1234 = vmul.f32 1.0, %v1233
      %v1235 = vrcp.pop %v1137
      %v1236 = vmul.f32 1.0, %v1235
      %v1237 = vrcp.pop %v1138
      %v1238 = vmul.f32 1.0, %v1237
      %v1239 = vrcp.pop %v1139
      %v1240 = vmul.f32 1.0, %v1239
      %v1241 = vrcp.pop %v1140
      %v1242 = vmul.f32 1.0, %v1241
      %v1243 = vrcp.pop %v1141
      %v1244 = vmul.f32 1.0, %v1243
      %v1245 = vrcp.pop %v1142
      %v1246 = vmul.f32 1.0, %v1245
      %v1247 = vrcp.pop %v1143
      %v1248 = vmul.f32 1.0, %v1247
      %v1249 = vrcp.pop %v1144
      %v1250 = vmul.f32 1.0, %v1249
      %v1251 = vrcp.pop %v1145
      %v1252 = vmul.f32 1.0, %v1251
      %v1253 = vrcp.pop %v1146
      %v1254 = vmul.f32 1.0, %v1253
      %v1255 = vrcp.pop %v1147
      %v1256 = vmul.f32 1.0, %v1255
      %v1257 = vrcp.pop %v1148
      %v1258 = vmul.f32 1.0, %v1257
      %v1259 = vrcp.pop %v1149
      %v1260 = vmul.f32 1.0, %v1259
      %v1261 = vrcp.pop %v1150
      %v1262 = vmul.f32 1.0, %v1261
      %v1263 = vrcp.pop %v1151
      %v1264 = vmul.f32 1.0, %v1263
      %v1265 = vrcp.pop %v1152
      %v1266 = vmul.f32 1.0, %v1265
      %v1267 = vrcp.pop %v1153
      %v1268 = vmul.f32 1.0, %v1267
      %v1269 = vrcp.pop %v1154
      %v1270 = vmul.f32 1.0, %v1269
      %v1271 = vrcp.pop %v1155
      %v1272 = vmul.f32 1.0, %v1271
      %v1273 = vrcp.pop %v1156
      %v1274 = vmul.f32 1.0, %v1273
      %v1275 = vrcp.pop %v1157
      %v1276 = vmul.f32 1.0, %v1275
      %v1277 = vrcp.pop %v1158
      %v1278 = vmul.f32 1.0, %v1277
      %v1279 = vrcp.pop %v1159
      %v1280 = vmul.f32 1.0, %v1279
      %v1281 = vrcp.pop %v1160
      %v1282 = vmul.f32 1.0, %v1281
      %v1283 = vrcp.pop %v1161
      %v1284 = vmul.f32 1.0, %v1283
      %v1285 = vrcp.pop %v1162
      %v1286 = vmul.f32 1.0, %v1285
      %v1287 = vrcp.pop %v1163
      %v1288 = vmul.f32 1.0, %v1287
      %v1289 = vrcp.pop %v1164
      %v1290 = vmul.f32 1.0, %v1289
      %v1291 = vrcp.pop %v1165
      %v1292 = vmul.f32 1.0, %v1291
      %v1293 = vrcp.pop %v1166
      %v1294 = vmul.f32 1.0, %v1293
      %v1295 = vpack.c.bf16 %v1170, %v1168
      %v1296 = vpack.c.bf16 %v1174, %v1172
      %v1297 = vpack.c.bf16 %v1178, %v1176
      %v1298 = vpack.c.bf16 %v1182, %v1180
      %v1299 = vpack.c.bf16 %v1186, %v1184
      %v1300 = vpack.c.bf16 %v1190, %v1188
      %v1301 = vpack.c.bf16 %v1194, %v1192
      %v1302 = vpack.c.bf16 %v1198, %v1196
      %v1303 = vpack.c.bf16 %v1202, %v1200
      %v1304 = vpack.c.bf16 %v1206, %v1204
      %v1305 = vpack.c.bf16 %v1210, %v1208
      %v1306 = vpack.c.bf16 %v1214, %v1212
      %v1307 = vpack.c.bf16 %v1218, %v1216
      %v1308 = vpack.c.bf16 %v1222, %v1220
      %v1309 = vpack.c.bf16 %v1226, %v1224
      %v1310 = vpack.c.bf16 %v1230, %v1228
      %v1311 = vpack.c.bf16 %v1234, %v1232
      %v1312 = vpack.c.bf16 %v1238, %v1236
      %v1313 = vpack.c.bf16 %v1242, %v1240
      %v1314 = vpack.c.bf16 %v1246, %v1244
      %v1315 = vpack.c.bf16 %v1250, %v1248
      %v1316 = vpack.c.bf16 %v1254, %v1252
      %v1317 = vpack.c.bf16 %v1258, %v1256
      %v1318 = vpack.c.bf16 %v1262, %v1260
      %v1319 = vpack.c.bf16 %v1266, %v1264
      %v1320 = vpack.c.bf16 %v1270, %v1268
      %v1321 = vpack.c.bf16 %v1274, %v1272
      %v1322 = vpack.c.bf16 %v1278, %v1276
      %v1323 = vpack.c.bf16 %v1282, %v1280
      %v1324 = vpack.c.bf16 %v1286, %v1284
      %v1325 = vpack.c.bf16 %v1290, %v1288
      %v1326 = vpack.c.bf16 %v1294, %v1292
      %v1327 = vld [vmem:[%s4] sm:$0xf]
      %v1328 = vld [vmem:[%s4 + $0x4] sm:$0xf]
      %v1329 = vld [vmem:[%s4 + $0x8] sm:$0xf]
      %v1330 = vld [vmem:[%s4 + $0xc] sm:$0xf]
      %v1331 = vld [vmem:[%s4 + $0x10] sm:$0xf]
      %v1332 = vld [vmem:[%s4 + $0x14] sm:$0xf]
      %v1333 = vld [vmem:[%s4 + $0x18] sm:$0xf]
      %v1334 = vld [vmem:[%s4 + $0x1c] sm:$0xf]
      %v1335 = vld [vmem:[%s4 + $0x20] sm:$0xf]
      %v1336 = vld [vmem:[%s4 + $0x24] sm:$0xf]
      %v1337 = vld [vmem:[%s4 + $0x28] sm:$0xf]
      %v1338 = vld [vmem:[%s4 + $0x2c] sm:$0xf]
      %v1339 = vld [vmem:[%s4 + $0x30] sm:$0xf]
      %v1340 = vld [vmem:[%s4 + $0x34] sm:$0xf]
      %v1341 = vld [vmem:[%s4 + $0x38] sm:$0xf]
      %v1342 = vld [vmem:[%s4 + $0x3c] sm:$0xf]
      %v1343 = vld [vmem:[%s5] sm:$0x1]
      %v1345 = vlaneseq
      %v1346 = vshrl.u32 %v1345, 7
      %v1347 = vsub.s32 0, %v1346
      %v1348 = vrot.slane %v1343, %v1347
      %v1366 = vunpack.c.l.b16 %v1327
      %v1367 = vunpack.c.l.b16 %v1328
      %v1368 = vunpack.c.l.b16 %v1329
      %v1369 = vunpack.c.l.b16 %v1330
      %v1370 = vunpack.c.l.b16 %v1331
      %v1371 = vunpack.c.l.b16 %v1332
      %v1372 = vunpack.c.l.b16 %v1333
      %v1373 = vunpack.c.l.b16 %v1334
      %v1374 = vunpack.c.l.b16 %v1335
      %v1375 = vunpack.c.l.b16 %v1336
      %v1376 = vunpack.c.l.b16 %v1337
      %v1377 = vunpack.c.l.b16 %v1338
      %v1378 = vunpack.c.l.b16 %v1339
      %v1379 = vunpack.c.l.b16 %v1340
      %v1380 = vunpack.c.l.b16 %v1341
      %v1381 = vunpack.c.l.b16 %v1342
      %v1382 = vpack.c.b16 %v1367, %v1366
      %v1383 = vpack.c.b16 %v1369, %v1368
      %v1384 = vpack.c.b16 %v1371, %v1370
      %v1385 = vpack.c.b16 %v1373, %v1372
      %v1386 = vpack.c.b16 %v1375, %v1374
      %v1387 = vpack.c.b16 %v1377, %v1376
      %v1388 = vpack.c.b16 %v1379, %v1378
      %v1389 = vpack.c.b16 %v1381, %v1380
      %1398 = vmatprep.subr.bf16.mxu0 0
      %1399 = vmatpush1.bf16.msra.mxu0 %v1382
      %1400 = vmatprep.subr.bf16.mxu0 0
      %1401 = vmatpush1.bf16.msra.mxu0 %v1383
      %1402 = vmatprep.subr.bf16.mxu0 0
      %1403 = vmatpush1.bf16.msra.mxu0 %v1384
      %1404 = vmatprep.subr.bf16.mxu0 0
      %1405 = vmatpush1.bf16.msra.mxu0 %v1385
      %1406 = vmatprep.subr.bf16.mxu0 0
      %1407 = vmatpush1.bf16.msra.mxu0 %v1386
      %1408 = vmatprep.subr.bf16.mxu0 0
      %1409 = vmatpush1.bf16.msra.mxu0 %v1387
      %1410 = vmatprep.subr.bf16.mxu0 0
      %1411 = vmatpush1.bf16.msra.mxu0 %v1388
      %1412 = vmatprep.subr.bf16.mxu0 0
      %1413 = vmatpush1.bf16.msra.mxu0 %v1389
      %1414 = vmatprep.subr.bf16.mxu0 0
      %1415 = vmatpush1.bf16.msra.mxu0 0
      %1416 = vmatprep.subr.bf16.mxu0 0
      %1417 = vmatpush1.bf16.msra.mxu0 0
      %1418 = vmatprep.subr.bf16.mxu0 0
      %1419 = vmatpush1.bf16.msra.mxu0 0
      %1420 = vmatprep.subr.bf16.mxu0 0
      %1421 = vmatpush1.bf16.msra.mxu0 0
      %1422 = vmatprep.subr.bf16.mxu0 0
      %1423 = vmatpush1.bf16.msra.mxu0 0
      %1424 = vmatprep.subr.bf16.mxu0 0
      %1425 = vmatpush1.bf16.msra.mxu0 0
      %1426 = vmatprep.subr.bf16.mxu0 0
      %1427 = vmatpush1.bf16.msra.mxu0 0
      %1428 = vmatprep.subr.bf16.mxu0 0
      %1429 = vmatpush1.bf16.msra.mxu0 0
      %1430 = vmatprep.mubr.bf16.mxu0 0
      %1431 = vmatmul.mubr.bf16.gmra.mrb[0].mxu0 %v1295
      %v1432 = vpop.f32.mrb[0].mxu0
      %v1433 = vadd.f32 %v1348, %v1432
      %v1434 = vpop.f32.mrb[0].mxu0
      %v1435 = vpop.f32.mrb[0].mxu0
      %v1436 = vadd.f32 %v1348, %v1435
      %v1437 = vpop.f32.mrb[0].mxu0
      %1438 = vmatprep.mubr.bf16.mxu0 0
      %1439 = vmatmul.mubr.bf16.gmra.mrb[0].mxu0 %v1296
      %v1440 = vpop.f32.mrb[0].mxu0
      %v1441 = vadd.f32 %v1348, %v1440
      %v1442 = vpop.f32.mrb[0].mxu0
      %v1443 = vpop.f32.mrb[0].mxu0
      %v1444 = vadd.f32 %v1348, %v1443
      %v1445 = vpop.f32.mrb[0].mxu0
      %1446 = vmatprep.mubr.bf16.mxu0 0
      %1447 = vmatmul.mubr.bf16.gmra.mrb[0].mxu0 %v1297
      %v1448 = vpop.f32.mrb[0].mxu0
      %v1449 = vadd.f32 %v1348, %v1448
      %v1450 = vpop.f32.mrb[0].mxu0
      %v1451 = vpop.f32.mrb[0].mxu0
      %v1452 = vadd.f32 %v1348, %v1451
      %v1453 = vpop.f32.mrb[0].mxu0
      %1454 = vmatprep.mubr.bf16.mxu0 0
      %1455 = vmatmul.mubr.bf16.gmra.mrb[0].mxu0 %v1298
      %v1456 = vpop.f32.mrb[0].mxu0
      %v1457 = vadd.f32 %v1348, %v1456
      %v1458 = vpop.f32.mrb[0].mxu0
      %v1459 = vpop.f32.mrb[0].mxu0
      %v1460 = vadd.f32 %v1348, %v1459
      %v1461 = vpop.f32.mrb[0].mxu0
      %1462 = vmatprep.mubr.bf16.mxu0 0
      %1463 = vmatmul.mubr.bf16.gmra.mrb[0].mxu0 %v1299
      %v1464 = vpop.f32.mrb[0].mxu0
      %v1465 = vadd.f32 %v1348, %v1464
      %v1466 = vpop.f32.mrb[0].mxu0
      %v1467 = vpop.f32.mrb[0].mxu0
      %v1468 = vadd.f32 %v1348, %v1467
      %v1469 = vpop.f32.mrb[0].mxu0
      %1470 = vmatprep.mubr.bf16.mxu0 0
      %1471 = vmatmul.mubr.bf16.gmra.mrb[0].mxu0 %v1300
      %v1472 = vpop.f32.mrb[0].mxu0
      %v1473 = vadd.f32 %v1348, %v1472
      %v1474 = vpop.f32.mrb[0].mxu0
      %v1475 = vpop.f32.mrb[0].mxu0
      %v1476 = vadd.f32 %v1348, %v1475
      %v1477 = vpop.f32.mrb[0].mxu0
      %1478 = vmatprep.mubr.bf16.mxu0 0
      %1479 = vmatmul.mubr.bf16.gmra.mrb[0].mxu0 %v1301
      %v1480 = vpop.f32.mrb[0].mxu0
      %v1481 = vadd.f32 %v1348, %v1480
      %v1482 = vpop.f32.mrb[0].mxu0
      %v1483 = vpop.f32.mrb[0].mxu0
      %v1484 = vadd.f32 %v1348, %v1483
      %v1485 = vpop.f32.mrb[0].mxu0
      %1486 = vmatprep.mubr.bf16.mxu0 0
      %1487 = vmatmul.mubr.bf16.gmra.mrb[0].mxu0 %v1302
      %v1488 = vpop.f32.mrb[0].mxu0
      %v1489 = vadd.f32 %v1348, %v1488
      %v1490 = vpop.f32.mrb[0].mxu0
      %v1491 = vpop.f32.mrb[0].mxu0
      %v1492 = vadd.f32 %v1348, %v1491
      %v1493 = vpop.f32.mrb[0].mxu0
      %1494 = vmatprep.mubr.bf16.mxu0 0
      %1495 = vmatmul.mubr.bf16.gmra.mrb[0].mxu0 %v1303
      %v1496 = vpop.f32.mrb[0].mxu0
      %v1497 = vadd.f32 %v1348, %v1496
      %v1498 = vpop.f32.mrb[0].mxu0
      %v1499 = vpop.f32.mrb[0].mxu0
      %v1500 = vadd.f32 %v1348, %v1499
      %v1501 = vpop.f32.mrb[0].mxu0
      %1502 = vmatprep.mubr.bf16.mxu0 0
      %1503 = vmatmul.mubr.bf16.gmra.mrb[0].mxu0 %v1304
      %v1504 = vpop.f32.mrb[0].mxu0
      %v1505 = vadd.f32 %v1348, %v1504
      %v1506 = vpop.f32.mrb[0].mxu0
      %v1507 = vpop.f32.mrb[0].mxu0
      %v1508 = vadd.f32 %v1348, %v1507
      %v1509 = vpop.f32.mrb[0].mxu0
      %1510 = vmatprep.mubr.bf16.mxu0 0
      %1511 = vmatmul.mubr.bf16.gmra.mrb[0].mxu0 %v1305
      %v1512 = vpop.f32.mrb[0].mxu0
      %v1513 = vadd.f32 %v1348, %v1512
      %v1514 = vpop.f32.mrb[0].mxu0
      %v1515 = vpop.f32.mrb[0].mxu0
      %v1516 = vadd.f32 %v1348, %v1515
      %v1517 = vpop.f32.mrb[0].mxu0
      %1518 = vmatprep.mubr.bf16.mxu0 0
      %1519 = vmatmul.mubr.bf16.gmra.mrb[0].mxu0 %v1306
      %v1520 = vpop.f32.mrb[0].mxu0
      %v1521 = vadd.f32 %v1348, %v1520
      %v1522 = vpop.f32.mrb[0].mxu0
      %v1523 = vpop.f32.mrb[0].mxu0
      %v1524 = vadd.f32 %v1348, %v1523
      %v1525 = vpop.f32.mrb[0].mxu0
      %1526 = vmatprep.mubr.bf16.mxu0 0
      %1527 = vmatmul.mubr.bf16.gmra.mrb[0].mxu0 %v1307
      %v1528 = vpop.f32.mrb[0].mxu0
      %v1529 = vadd.f32 %v1348, %v1528
      %v1530 = vpop.f32.mrb[0].mxu0
      %v1531 = vpop.f32.mrb[0].mxu0
      %v1532 = vadd.f32 %v1348, %v1531
      %v1533 = vpop.f32.mrb[0].mxu0
      %1534 = vmatprep.mubr.bf16.mxu0 0
      %1535 = vmatmul.mubr.bf16.gmra.mrb[0].mxu0 %v1308
      %v1536 = vpop.f32.mrb[0].mxu0
      %v1537 = vadd.f32 %v1348, %v1536
      %v1538 = vpop.f32.mrb[0].mxu0
      %v1539 = vpop.f32.mrb[0].mxu0
      %v1540 = vadd.f32 %v1348, %v1539
      %v1541 = vpop.f32.mrb[0].mxu0
      %1542 = vmatprep.mubr.bf16.mxu0 0
      %1543 = vmatmul.mubr.bf16.gmra.mrb[0].mxu0 %v1309
      %v1544 = vpop.f32.mrb[0].mxu0
      %v1545 = vadd.f32 %v1348, %v1544
      %v1546 = vpop.f32.mrb[0].mxu0
      %v1547 = vpop.f32.mrb[0].mxu0
      %v1548 = vadd.f32 %v1348, %v1547
      %v1549 = vpop.f32.mrb[0].mxu0
      %1550 = vmatprep.mubr.bf16.mxu0 0
      %1551 = vmatmul.mubr.bf16.gmra.mrb[0].mxu0 %v1310
      %v1552 = vpop.f32.mrb[0].mxu0
      %v1553 = vadd.f32 %v1348, %v1552
      %v1554 = vpop.f32.mrb[0].mxu0
      %v1555 = vpop.f32.mrb[0].mxu0
      %v1556 = vadd.f32 %v1348, %v1555
      %v1557 = vpop.f32.mrb[0].mxu0
      %1558 = vmatprep.mubr.bf16.mxu0 0
      %1559 = vmatmul.mubr.bf16.gmra.mrb[0].mxu0 %v1311
      %v1560 = vpop.f32.mrb[0].mxu0
      %v1561 = vadd.f32 %v1348, %v1560
      %v1562 = vpop.f32.mrb[0].mxu0
      %v1563 = vpop.f32.mrb[0].mxu0
      %v1564 = vadd.f32 %v1348, %v1563
      %v1565 = vpop.f32.mrb[0].mxu0
      %1566 = vmatprep.mubr.bf16.mxu0 0
      %1567 = vmatmul.mubr.bf16.gmra.mrb[0].mxu0 %v1312
      %v1568 = vpop.f32.mrb[0].mxu0
      %v1569 = vadd.f32 %v1348, %v1568
      %v1570 = vpop.f32.mrb[0].mxu0
      %v1571 = vpop.f32.mrb[0].mxu0
      %v1572 = vadd.f32 %v1348, %v1571
      %v1573 = vpop.f32.mrb[0].mxu0
      %1574 = vmatprep.mubr.bf16.mxu0 0
      %1575 = vmatmul.mubr.bf16.gmra.mrb[0].mxu0 %v1313
      %v1576 = vpop.f32.mrb[0].mxu0
      %v1577 = vadd.f32 %v1348, %v1576
      %v1578 = vpop.f32.mrb[0].mxu0
      %v1579 = vpop.f32.mrb[0].mxu0
      %v1580 = vadd.f32 %v1348, %v1579
      %v1581 = vpop.f32.mrb[0].mxu0
      %1582 = vmatprep.mubr.bf16.mxu0 0
      %1583 = vmatmul.mubr.bf16.gmra.mrb[0].mxu0 %v1314
      %v1584 = vpop.f32.mrb[0].mxu0
      %v1585 = vadd.f32 %v1348, %v1584
      %v1586 = vpop.f32.mrb[0].mxu0
      %v1587 = vpop.f32.mrb[0].mxu0
      %v1588 = vadd.f32 %v1348, %v1587
      %v1589 = vpop.f32.mrb[0].mxu0
      %1590 = vmatprep.mubr.bf16.mxu0 0
      %1591 = vmatmul.mubr.bf16.gmra.mrb[0].mxu0 %v1315
      %v1592 = vpop.f32.mrb[0].mxu0
      %v1593 = vadd.f32 %v1348, %v1592
      %v1594 = vpop.f32.mrb[0].mxu0
      %v1595 = vpop.f32.mrb[0].mxu0
      %v1596 = vadd.f32 %v1348, %v1595
      %v1597 = vpop.f32.mrb[0].mxu0
      %1598 = vmatprep.mubr.bf16.mxu0 0
      %1599 = vmatmul.mubr.bf16.gmra.mrb[0].mxu0 %v1316
      %v1600 = vpop.f32.mrb[0].mxu0
      %v1601 = vadd.f32 %v1348, %v1600
      %v1602 = vpop.f32.mrb[0].mxu0
      %v1603 = vpop.f32.mrb[0].mxu0
      %v1604 = vadd.f32 %v1348, %v1603
      %v1605 = vpop.f32.mrb[0].mxu0
      %1606 = vmatprep.mubr.bf16.mxu0 0
      %1607 = vmatmul.mubr.bf16.gmra.mrb[0].mxu0 %v1317
      %v1608 = vpop.f32.mrb[0].mxu0
      %v1609 = vadd.f32 %v1348, %v1608
      %v1610 = vpop.f32.mrb[0].mxu0
      %v1611 = vpop.f32.mrb[0].mxu0
      %v1612 = vadd.f32 %v1348, %v1611
      %v1613 = vpop.f32.mrb[0].mxu0
      %1614 = vmatprep.mubr.bf16.mxu0 0
      %1615 = vmatmul.mubr.bf16.gmra.mrb[0].mxu0 %v1318
      %v1616 = vpop.f32.mrb[0].mxu0
      %v1617 = vadd.f32 %v1348, %v1616
      %v1618 = vpop.f32.mrb[0].mxu0
      %v1619 = vpop.f32.mrb[0].mxu0
      %v1620 = vadd.f32 %v1348, %v1619
      %v1621 = vpop.f32.mrb[0].mxu0
      %1622 = vmatprep.mubr.bf16.mxu0 0
      %1623 = vmatmul.mubr.bf16.gmra.mrb[0].mxu0 %v1319
      %v1624 = vpop.f32.mrb[0].mxu0
      %v1625 = vadd.f32 %v1348, %v1624
      %v1626 = vpop.f32.mrb[0].mxu0
      %v1627 = vpop.f32.mrb[0].mxu0
      %v1628 = vadd.f32 %v1348, %v1627
      %v1629 = vpop.f32.mrb[0].mxu0
      %1630 = vmatprep.mubr.bf16.mxu0 0
      %1631 = vmatmul.mubr.bf16.gmra.mrb[0].mxu0 %v1320
      %v1632 = vpop.f32.mrb[0].mxu0
      %v1633 = vadd.f32 %v1348, %v1632
      %v1634 = vpop.f32.mrb[0].mxu0
      %v1635 = vpop.f32.mrb[0].mxu0
      %v1636 = vadd.f32 %v1348, %v1635
      %v1637 = vpop.f32.mrb[0].mxu0
      %1638 = vmatprep.mubr.bf16.mxu0 0
      %1639 = vmatmul.mubr.bf16.gmra.mrb[0].mxu0 %v1321
      %v1640 = vpop.f32.mrb[0].mxu0
      %v1641 = vadd.f32 %v1348, %v1640
      %v1642 = vpop.f32.mrb[0].mxu0
      %v1643 = vpop.f32.mrb[0].mxu0
      %v1644 = vadd.f32 %v1348, %v1643
      %v1645 = vpop.f32.mrb[0].mxu0
      %1646 = vmatprep.mubr.bf16.mxu0 0
      %1647 = vmatmul.mubr.bf16.gmra.mrb[0].mxu0 %v1322
      %v1648 = vpop.f32.mrb[0].mxu0
      %v1649 = vadd.f32 %v1348, %v1648
      %v1650 = vpop.f32.mrb[0].mxu0
      %v1651 = vpop.f32.mrb[0].mxu0
      %v1652 = vadd.f32 %v1348, %v1651
      %v1653 = vpop.f32.mrb[0].mxu0
      %1654 = vmatprep.mubr.bf16.mxu0 0
      %1655 = vmatmul.mubr.bf16.gmra.mrb[0].mxu0 %v1323
      %v1656 = vpop.f32.mrb[0].mxu0
      %v1657 = vadd.f32 %v1348, %v1656
      %v1658 = vpop.f32.mrb[0].mxu0
      %v1659 = vpop.f32.mrb[0].mxu0
      %v1660 = vadd.f32 %v1348, %v1659
      %v1661 = vpop.f32.mrb[0].mxu0
      %1662 = vmatprep.mubr.bf16.mxu0 0
      %1663 = vmatmul.mubr.bf16.gmra.mrb[0].mxu0 %v1324
      %v1664 = vpop.f32.mrb[0].mxu0
      %v1665 = vadd.f32 %v1348, %v1664
      %v1666 = vpop.f32.mrb[0].mxu0
      %v1667 = vpop.f32.mrb[0].mxu0
      %v1668 = vadd.f32 %v1348, %v1667
      %v1669 = vpop.f32.mrb[0].mxu0
      %1670 = vmatprep.mubr.bf16.mxu0 0
      %1671 = vmatmul.mubr.bf16.gmra.mrb[0].mxu0 %v1325
      %v1672 = vpop.f32.mrb[0].mxu0
      %v1673 = vadd.f32 %v1348, %v1672
      %v1674 = vpop.f32.mrb[0].mxu0
      %v1675 = vpop.f32.mrb[0].mxu0
      %v1676 = vadd.f32 %v1348, %v1675
      %v1677 = vpop.f32.mrb[0].mxu0
      %1678 = vmatprep.mubr.bf16.mxu0 0
      %1679 = vmatmul.mubr.bf16.gmra.mrb[0].mxu0 %v1326
      %v1680 = vpop.f32.mrb[0].mxu0
      %v1681 = vadd.f32 %v1348, %v1680
      %v1682 = vpop.f32.mrb[0].mxu0
      %v1683 = vpop.f32.mrb[0].mxu0
      %v1684 = vadd.f32 %v1348, %v1683
      %v1685 = vpop.f32.mrb[0].mxu0
      %1686 = vdwg.mxu0
      %1687 = vst [vmem:[%s275] sm:$0xff] %v1433
      %1688 = vst [vmem:[%s275 + $0x8] sm:$0xff] %v1436
      %1689 = vst [vmem:[%s275 + $0x10] sm:$0xff] %v1441
      %1690 = vst [vmem:[%s275 + $0x18] sm:$0xff] %v1444
      %1691 = vst [vmem:[%s275 + $0x20] sm:$0xff] %v1449
      %1692 = vst [vmem:[%s275 + $0x28] sm:$0xff] %v1452
      %1693 = vst [vmem:[%s275 + $0x30] sm:$0xff] %v1457
      %1694 = vst [vmem:[%s275 + $0x38] sm:$0xff] %v1460
      %1695 = vst [vmem:[%s275 + $0x40] sm:$0xff] %v1465
      %1696 = vst [vmem:[%s275 + $0x48] sm:$0xff] %v1468
      %1697 = vst [vmem:[%s275 + $0x50] sm:$0xff] %v1473
      %1698 = vst [vmem:[%s275 + $0x58] sm:$0xff] %v1476
      %1699 = vst [vmem:[%s275 + $0x60] sm:$0xff] %v1481
      %1700 = vst [vmem:[%s275 + $0x68] sm:$0xff] %v1484
      %1701 = vst [vmem:[%s275 + $0x70] sm:$0xff] %v1489
      %1702 = vst [vmem:[%s275 + $0x78] sm:$0xff] %v1492
      %1703 = vst [vmem:[%s275 + $0x80] sm:$0xff] %v1497
      %1704 = vst [vmem:[%s275 + $0x88] sm:$0xff] %v1500
      %1705 = vst [vmem:[%s275 + $0x90] sm:$0xff] %v1505
      %1706 = vst [vmem:[%s275 + $0x98] sm:$0xff] %v1508
      %1707 = vst [vmem:[%s275 + $0xa0] sm:$0xff] %v1513
      %1708 = vst [vmem:[%s275 + $0xa8] sm:$0xff] %v1516
      %1709 = vst [vmem:[%s275 + $0xb0] sm:$0xff] %v1521
      %1710 = vst [vmem:[%s275 + $0xb8] sm:$0xff] %v1524
      %1711 = vst [vmem:[%s275 + $0xc0] sm:$0xff] %v1529
      %1712 = vst [vmem:[%s275 + $0xc8] sm:$0xff] %v1532
      %1713 = vst [vmem:[%s275 + $0xd0] sm:$0xff] %v1537
      %1714 = vst [vmem:[%s275 + $0xd8] sm:$0xff] %v1540
      %1715 = vst [vmem:[%s275 + $0xe0] sm:$0xff] %v1545
      %1716 = vst [vmem:[%s275 + $0xe8] sm:$0xff] %v1548
      %1717 = vst [vmem:[%s275 + $0xf0] sm:$0xff] %v1553
      %1718 = vst [vmem:[%s275 + $0xf8] sm:$0xff] %v1556
      %1719 = vst [vmem:[%s275 + $0x100] sm:$0xff] %v1561
      %1720 = vst [vmem:[%s275 + $0x108] sm:$0xff] %v1564
      %1721 = vst [vmem:[%s275 + $0x110] sm:$0xff] %v1569
      %1722 = vst [vmem:[%s275 + $0x118] sm:$0xff] %v1572
      %1723 = vst [vmem:[%s275 + $0x120] sm:$0xff] %v1577
      %1724 = vst [vmem:[%s275 + $0x128] sm:$0xff] %v1580
      %1725 = vst [vmem:[%s275 + $0x130] sm:$0xff] %v1585
      %1726 = vst [vmem:[%s275 + $0x138] sm:$0xff] %v1588
      %1727 = vst [vmem:[%s275 + $0x140] sm:$0xff] %v1593
      %1728 = vst [vmem:[%s275 + $0x148] sm:$0xff] %v1596
      %1729 = vst [vmem:[%s275 + $0x150] sm:$0xff] %v1601
      %1730 = vst [vmem:[%s275 + $0x158] sm:$0xff] %v1604
      %1731 = vst [vmem:[%s275 + $0x160] sm:$0xff] %v1609
      %1732 = vst [vmem:[%s275 + $0x168] sm:$0xff] %v1612
      %1733 = vst [vmem:[%s275 + $0x170] sm:$0xff] %v1617
      %1734 = vst [vmem:[%s275 + $0x178] sm:$0xff] %v1620
      %1735 = vst [vmem:[%s275 + $0x180] sm:$0xff] %v1625
      %1736 = vst [vmem:[%s275 + $0x188] sm:$0xff] %v1628
      %1737 = vst [vmem:[%s275 + $0x190] sm:$0xff] %v1633
      %1738 = vst [vmem:[%s275 + $0x198] sm:$0xff] %v1636
      %1739 = vst [vmem:[%s275 + $0x1a0] sm:$0xff] %v1641
      %1740 = vst [vmem:[%s275 + $0x1a8] sm:$0xff] %v1644
      %1741 = vst [vmem:[%s275 + $0x1b0] sm:$0xff] %v1649
      %1742 = vst [vmem:[%s275 + $0x1b8] sm:$0xff] %v1652
      %1743 = vst [vmem:[%s275 + $0x1c0] sm:$0xff] %v1657
      %1744 = vst [vmem:[%s275 + $0x1c8] sm:$0xff] %v1660
      %1745 = vst [vmem:[%s275 + $0x1d0] sm:$0xff] %v1665
      %1746 = vst [vmem:[%s275 + $0x1d8] sm:$0xff] %v1668
      %1747 = vst [vmem:[%s275 + $0x1e0] sm:$0xff] %v1673
      %1748 = vst [vmem:[%s275 + $0x1e8] sm:$0xff] %v1676
      %1749 = vst [vmem:[%s275 + $0x1f0] sm:$0xff] %v1681
      %1750 = vst [vmem:[%s275 + $0x1f8] sm:$0xff] %v1684
      %v1751 = vld [vmem:[%s275] sm:$0xff]
      %v1752 = vld [vmem:[%s275 + $0x8] sm:$0xff]
      %v1753 = vld [vmem:[%s275 + $0x10] sm:$0xff]
      %v1754 = vld [vmem:[%s275 + $0x18] sm:$0xff]
      %v1755 = vld [vmem:[%s275 + $0x20] sm:$0xff]
      %v1756 = vld [vmem:[%s275 + $0x28] sm:$0xff]
      %v1757 = vld [vmem:[%s275 + $0x30] sm:$0xff]
      %v1758 = vld [vmem:[%s275 + $0x38] sm:$0xff]
      %v1759 = vld [vmem:[%s275 + $0x40] sm:$0xff]
      %v1760 = vld [vmem:[%s275 + $0x48] sm:$0xff]
      %v1761 = vld [vmem:[%s275 + $0x50] sm:$0xff]
      %v1762 = vld [vmem:[%s275 + $0x58] sm:$0xff]
      %v1763 = vld [vmem:[%s275 + $0x60] sm:$0xff]
      %v1764 = vld [vmem:[%s275 + $0x68] sm:$0xff]
      %v1765 = vld [vmem:[%s275 + $0x70] sm:$0xff]
      %v1766 = vld [vmem:[%s275 + $0x78] sm:$0xff]
      %v1767 = vld [vmem:[%s275 + $0x80] sm:$0xff]
      %v1768 = vld [vmem:[%s275 + $0x88] sm:$0xff]
      %v1769 = vld [vmem:[%s275 + $0x90] sm:$0xff]
      %v1770 = vld [vmem:[%s275 + $0x98] sm:$0xff]
      %v1771 = vld [vmem:[%s275 + $0xa0] sm:$0xff]
      %v1772 = vld [vmem:[%s275 + $0xa8] sm:$0xff]
      %v1773 = vld [vmem:[%s275 + $0xb0] sm:$0xff]
      %v1774 = vld [vmem:[%s275 + $0xb8] sm:$0xff]
      %v1775 = vld [vmem:[%s275 + $0xc0] sm:$0xff]
      %v1776 = vld [vmem:[%s275 + $0xc8] sm:$0xff]
      %v1777 = vld [vmem:[%s275 + $0xd0] sm:$0xff]
      %v1778 = vld [vmem:[%s275 + $0xd8] sm:$0xff]
      %v1779 = vld [vmem:[%s275 + $0xe0] sm:$0xff]
      %v1780 = vld [vmem:[%s275 + $0xe8] sm:$0xff]
      %v1781 = vld [vmem:[%s275 + $0xf0] sm:$0xff]
      %v1782 = vld [vmem:[%s275 + $0xf8] sm:$0xff]
      %v1783 = vld [vmem:[%s275 + $0x100] sm:$0xff]
      %v1784 = vld [vmem:[%s275 + $0x108] sm:$0xff]
      %v1785 = vld [vmem:[%s275 + $0x110] sm:$0xff]
      %v1786 = vld [vmem:[%s275 + $0x118] sm:$0xff]
      %v1787 = vld [vmem:[%s275 + $0x120] sm:$0xff]
      %v1788 = vld [vmem:[%s275 + $0x128] sm:$0xff]
      %v1789 = vld [vmem:[%s275 + $0x130] sm:$0xff]
      %v1790 = vld [vmem:[%s275 + $0x138] sm:$0xff]
      %v1791 = vld [vmem:[%s275 + $0x140] sm:$0xff]
      %v1792 = vld [vmem:[%s275 + $0x148] sm:$0xff]
      %v1793 = vld [vmem:[%s275 + $0x150] sm:$0xff]
      %v1794 = vld [vmem:[%s275 + $0x158] sm:$0xff]
      %v1795 = vld [vmem:[%s275 + $0x160] sm:$0xff]
      %v1796 = vld [vmem:[%s275 + $0x168] sm:$0xff]
      %v1797 = vld [vmem:[%s275 + $0x170] sm:$0xff]
      %v1798 = vld [vmem:[%s275 + $0x178] sm:$0xff]
      %v1799 = vld [vmem:[%s275 + $0x180] sm:$0xff]
      %v1800 = vld [vmem:[%s275 + $0x188] sm:$0xff]
      %v1801 = vld [vmem:[%s275 + $0x190] sm:$0xff]
      %v1802 = vld [vmem:[%s275 + $0x198] sm:$0xff]
      %v1803 = vld [vmem:[%s275 + $0x1a0] sm:$0xff]
      %v1804 = vld [vmem:[%s275 + $0x1a8] sm:$0xff]
      %v1805 = vld [vmem:[%s275 + $0x1b0] sm:$0xff]
      %v1806 = vld [vmem:[%s275 + $0x1b8] sm:$0xff]
      %v1807 = vld [vmem:[%s275 + $0x1c0] sm:$0xff]
      %v1808 = vld [vmem:[%s275 + $0x1c8] sm:$0xff]
      %v1809 = vld [vmem:[%s275 + $0x1d0] sm:$0xff]
      %v1810 = vld [vmem:[%s275 + $0x1d8] sm:$0xff]
      %v1811 = vld [vmem:[%s275 + $0x1e0] sm:$0xff]
      %v1812 = vld [vmem:[%s275 + $0x1e8] sm:$0xff]
      %v1813 = vld [vmem:[%s275 + $0x1f0] sm:$0xff]
      %v1814 = vld [vmem:[%s275 + $0x1f8] sm:$0xff]
      %v1815 = vld [vmem:[%s269] sm:$0xff]
      %v1816 = vld [vmem:[%s269 + $0x8] sm:$0xff]
      %v1817 = vld [vmem:[%s269 + $0x10] sm:$0xff]
      %v1818 = vld [vmem:[%s269 + $0x18] sm:$0xff]
      %v1819 = vld [vmem:[%s269 + $0x20] sm:$0xff]
      %v1820 = vld [vmem:[%s269 + $0x28] sm:$0xff]
      %v1821 = vld [vmem:[%s269 + $0x30] sm:$0xff]
      %v1822 = vld [vmem:[%s269 + $0x38] sm:$0xff]
      %v1823 = vld [vmem:[%s269 + $0x40] sm:$0xff]
      %v1824 = vld [vmem:[%s269 + $0x48] sm:$0xff]
      %v1825 = vld [vmem:[%s269 + $0x50] sm:$0xff]
      %v1826 = vld [vmem:[%s269 + $0x58] sm:$0xff]
      %v1827 = vld [vmem:[%s269 + $0x60] sm:$0xff]
      %v1828 = vld [vmem:[%s269 + $0x68] sm:$0xff]
      %v1829 = vld [vmem:[%s269 + $0x70] sm:$0xff]
      %v1830 = vld [vmem:[%s269 + $0x78] sm:$0xff]
      %v1831 = vld [vmem:[%s269 + $0x80] sm:$0xff]
      %v1832 = vld [vmem:[%s269 + $0x88] sm:$0xff]
      %v1833 = vld [vmem:[%s269 + $0x90] sm:$0xff]
      %v1834 = vld [vmem:[%s269 + $0x98] sm:$0xff]
      %v1835 = vld [vmem:[%s269 + $0xa0] sm:$0xff]
      %v1836 = vld [vmem:[%s269 + $0xa8] sm:$0xff]
      %v1837 = vld [vmem:[%s269 + $0xb0] sm:$0xff]
      %v1838 = vld [vmem:[%s269 + $0xb8] sm:$0xff]
      %v1839 = vld [vmem:[%s269 + $0xc0] sm:$0xff]
      %v1840 = vld [vmem:[%s269 + $0xc8] sm:$0xff]
      %v1841 = vld [vmem:[%s269 + $0xd0] sm:$0xff]
      %v1842 = vld [vmem:[%s269 + $0xd8] sm:$0xff]
      %v1843 = vld [vmem:[%s269 + $0xe0] sm:$0xff]
      %v1844 = vld [vmem:[%s269 + $0xe8] sm:$0xff]
      %v1845 = vld [vmem:[%s269 + $0xf0] sm:$0xff]
      %v1846 = vld [vmem:[%s269 + $0xf8] sm:$0xff]
      %v1847 = vld [vmem:[%s269 + $0x100] sm:$0xff]
      %v1848 = vld [vmem:[%s269 + $0x108] sm:$0xff]
      %v1849 = vld [vmem:[%s269 + $0x110] sm:$0xff]
      %v1850 = vld [vmem:[%s269 + $0x118] sm:$0xff]
      %v1851 = vld [vmem:[%s269 + $0x120] sm:$0xff]
      %v1852 = vld [vmem:[%s269 + $0x128] sm:$0xff]
      %v1853 = vld [vmem:[%s269 + $0x130] sm:$0xff]
      %v1854 = vld [vmem:[%s269 + $0x138] sm:$0xff]
      %v1855 = vld [vmem:[%s269 + $0x140] sm:$0xff]
      %v1856 = vld [vmem:[%s269 + $0x148] sm:$0xff]
      %v1857 = vld [vmem:[%s269 + $0x150] sm:$0xff]
      %v1858 = vld [vmem:[%s269 + $0x158] sm:$0xff]
      %v1859 = vld [vmem:[%s269 + $0x160] sm:$0xff]
      %v1860 = vld [vmem:[%s269 + $0x168] sm:$0xff]
      %v1861 = vld [vmem:[%s269 + $0x170] sm:$0xff]
      %v1862 = vld [vmem:[%s269 + $0x178] sm:$0xff]
      %v1863 = vld [vmem:[%s269 + $0x180] sm:$0xff]
      %v1864 = vld [vmem:[%s269 + $0x188] sm:$0xff]
      %v1865 = vld [vmem:[%s269 + $0x190] sm:$0xff]
      %v1866 = vld [vmem:[%s269 + $0x198] sm:$0xff]
      %v1867 = vld [vmem:[%s269 + $0x1a0] sm:$0xff]
      %v1868 = vld [vmem:[%s269 + $0x1a8] sm:$0xff]
      %v1869 = vld [vmem:[%s269 + $0x1b0] sm:$0xff]
      %v1870 = vld [vmem:[%s269 + $0x1b8] sm:$0xff]
      %v1871 = vld [vmem:[%s269 + $0x1c0] sm:$0xff]
      %v1872 = vld [vmem:[%s269 + $0x1c8] sm:$0xff]
      %v1873 = vld [vmem:[%s269 + $0x1d0] sm:$0xff]
      %v1874 = vld [vmem:[%s269 + $0x1d8] sm:$0xff]
      %v1875 = vld [vmem:[%s269 + $0x1e0] sm:$0xff]
      %v1876 = vld [vmem:[%s269 + $0x1e8] sm:$0xff]
      %v1877 = vld [vmem:[%s269 + $0x1f0] sm:$0xff]
      %v1878 = vld [vmem:[%s269 + $0x1f8] sm:$0xff]
      %v1879 = vadd.f32 %v1751, %v1815
      %v1880 = vadd.f32 %v1752, %v1816
      %v1881 = vadd.f32 %v1753, %v1817
      %v1882 = vadd.f32 %v1754, %v1818
      %v1883 = vadd.f32 %v1755, %v1819
      %v1884 = vadd.f32 %v1756, %v1820
      %v1885 = vadd.f32 %v1757, %v1821
      %v1886 = vadd.f32 %v1758, %v1822
      %v1887 = vadd.f32 %v1759, %v1823
      %v1888 = vadd.f32 %v1760, %v1824
      %v1889 = vadd.f32 %v1761, %v1825
      %v1890 = vadd.f32 %v1762, %v1826
      %v1891 = vadd.f32 %v1763, %v1827
      %v1892 = vadd.f32 %v1764, %v1828
      %v1893 = vadd.f32 %v1765, %v1829
      %v1894 = vadd.f32 %v1766, %v1830
      %v1895 = vadd.f32 %v1767, %v1831
      %v1896 = vadd.f32 %v1768, %v1832
      %v1897 = vadd.f32 %v1769, %v1833
      %v1898 = vadd.f32 %v1770, %v1834
      %v1899 = vadd.f32 %v1771, %v1835
      %v1900 = vadd.f32 %v1772, %v1836
      %v1901 = vadd.f32 %v1773, %v1837
      %v1902 = vadd.f32 %v1774, %v1838
      %v1903 = vadd.f32 %v1775, %v1839
      %v1904 = vadd.f32 %v1776, %v1840
      %v1905 = vadd.f32 %v1777, %v1841
      %v1906 = vadd.f32 %v1778, %v1842
      %v1907 = vadd.f32 %v1779, %v1843
      %v1908 = vadd.f32 %v1780, %v1844
      %v1909 = vadd.f32 %v1781, %v1845
      %v1910 = vadd.f32 %v1782, %v1846
      %v1911 = vadd.f32 %v1783, %v1847
      %v1912 = vadd.f32 %v1784, %v1848
      %v1913 = vadd.f32 %v1785, %v1849
      %v1914 = vadd.f32 %v1786, %v1850
      %v1915 = vadd.f32 %v1787, %v1851
      %v1916 = vadd.f32 %v1788, %v1852
      %v1917 = vadd.f32 %v1789, %v1853
      %v1918 = vadd.f32 %v1790, %v1854
      %v1919 = vadd.f32 %v1791, %v1855
      %v1920 = vadd.f32 %v1792, %v1856
      %v1921 = vadd.f32 %v1793, %v1857
      %v1922 = vadd.f32 %v1794, %v1858
      %v1923 = vadd.f32 %v1795, %v1859
      %v1924 = vadd.f32 %v1796, %v1860
      %v1925 = vadd.f32 %v1797, %v1861
      %v1926 = vadd.f32 %v1798, %v1862
      %v1927 = vadd.f32 %v1799, %v1863
      %v1928 = vadd.f32 %v1800, %v1864
      %v1929 = vadd.f32 %v1801, %v1865
      %v1930 = vadd.f32 %v1802, %v1866
      %v1931 = vadd.f32 %v1803, %v1867
      %v1932 = vadd.f32 %v1804, %v1868
      %v1933 = vadd.f32 %v1805, %v1869
      %v1934 = vadd.f32 %v1806, %v1870
      %v1935 = vadd.f32 %v1807, %v1871
      %v1936 = vadd.f32 %v1808, %v1872
      %v1937 = vadd.f32 %v1809, %v1873
      %v1938 = vadd.f32 %v1810, %v1874
      %v1939 = vadd.f32 %v1811, %v1875
      %v1940 = vadd.f32 %v1812, %v1876
      %v1941 = vadd.f32 %v1813, %v1877
      %v1942 = vadd.f32 %v1814, %v1878
      %vm1943 = vcmask 130048
      %1944 = vst.msk [vmem:[%s275] sm:$0xff] %vm1943, %v1879
      %1945 = vst.msk [vmem:[%s275 + $0x8] sm:$0xff] %vm1943, %v1880
      %1946 = vst.msk [vmem:[%s275 + $0x10] sm:$0xff] %vm1943, %v1881
      %1947 = vst.msk [vmem:[%s275 + $0x18] sm:$0xff] %vm1943, %v1882
      %1948 = vst.msk [vmem:[%s275 + $0x20] sm:$0xff] %vm1943, %v1883
      %1949 = vst.msk [vmem:[%s275 + $0x28] sm:$0xff] %vm1943, %v1884
      %1950 = vst.msk [vmem:[%s275 + $0x30] sm:$0xff] %vm1943, %v1885
      %1951 = vst.msk [vmem:[%s275 + $0x38] sm:$0xff] %vm1943, %v1886
      %1952 = vst.msk [vmem:[%s275 + $0x40] sm:$0xff] %vm1943, %v1887
      %1953 = vst.msk [vmem:[%s275 + $0x48] sm:$0xff] %vm1943, %v1888
      %1954 = vst.msk [vmem:[%s275 + $0x50] sm:$0xff] %vm1943, %v1889
      %1955 = vst.msk [vmem:[%s275 + $0x58] sm:$0xff] %vm1943, %v1890
      %1956 = vst.msk [vmem:[%s275 + $0x60] sm:$0xff] %vm1943, %v1891
      %1957 = vst.msk [vmem:[%s275 + $0x68] sm:$0xff] %vm1943, %v1892
      %1958 = vst.msk [vmem:[%s275 + $0x70] sm:$0xff] %vm1943, %v1893
      %1959 = vst.msk [vmem:[%s275 + $0x78] sm:$0xff] %vm1943, %v1894
      %1960 = vst.msk [vmem:[%s275 + $0x80] sm:$0xff] %vm1943, %v1895
      %1961 = vst.msk [vmem:[%s275 + $0x88] sm:$0xff] %vm1943, %v1896
      %1962 = vst.msk [vmem:[%s275 + $0x90] sm:$0xff] %vm1943, %v1897
      %1963 = vst.msk [vmem:[%s275 + $0x98] sm:$0xff] %vm1943, %v1898
      %1964 = vst.msk [vmem:[%s275 + $0xa0] sm:$0xff] %vm1943, %v1899
      %1965 = vst.msk [vmem:[%s275 + $0xa8] sm:$0xff] %vm1943, %v1900
      %1966 = vst.msk [vmem:[%s275 + $0xb0] sm:$0xff] %vm1943, %v1901
      %1967 = vst.msk [vmem:[%s275 + $0xb8] sm:$0xff] %vm1943, %v1902
      %1968 = vst.msk [vmem:[%s275 + $0xc0] sm:$0xff] %vm1943, %v1903
      %1969 = vst.msk [vmem:[%s275 + $0xc8] sm:$0xff] %vm1943, %v1904
      %1970 = vst.msk [vmem:[%s275 + $0xd0] sm:$0xff] %vm1943, %v1905
      %1971 = vst.msk [vmem:[%s275 + $0xd8] sm:$0xff] %vm1943, %v1906
      %1972 = vst.msk [vmem:[%s275 + $0xe0] sm:$0xff] %vm1943, %v1907
      %1973 = vst.msk [vmem:[%s275 + $0xe8] sm:$0xff] %vm1943, %v1908
      %1974 = vst.msk [vmem:[%s275 + $0xf0] sm:$0xff] %vm1943, %v1909
      %1975 = vst.msk [vmem:[%s275 + $0xf8] sm:$0xff] %vm1943, %v1910
      %1976 = vst.msk [vmem:[%s275 + $0x100] sm:$0xff] %vm1943, %v1911
      %1977 = vst.msk [vmem:[%s275 + $0x108] sm:$0xff] %vm1943, %v1912
      %1978 = vst.msk [vmem:[%s275 + $0x110] sm:$0xff] %vm1943, %v1913
      %1979 = vst.msk [vmem:[%s275 + $0x118] sm:$0xff] %vm1943, %v1914
      %1980 = vst.msk [vmem:[%s275 + $0x120] sm:$0xff] %vm1943, %v1915
      %1981 = vst.msk [vmem:[%s275 + $0x128] sm:$0xff] %vm1943, %v1916
      %1982 = vst.msk [vmem:[%s275 + $0x130] sm:$0xff] %vm1943, %v1917
      %1983 = vst.msk [vmem:[%s275 + $0x138] sm:$0xff] %vm1943, %v1918
      %1984 = vst.msk [vmem:[%s275 + $0x140] sm:$0xff] %vm1943, %v1919
      %1985 = vst.msk [vmem:[%s275 + $0x148] sm:$0xff] %vm1943, %v1920
      %1986 = vst.msk [vmem:[%s275 + $0x150] sm:$0xff] %vm1943, %v1921
      %1987 = vst.msk [vmem:[%s275 + $0x158] sm:$0xff] %vm1943, %v1922
      %1988 = vst.msk [vmem:[%s275 + $0x160] sm:$0xff] %vm1943, %v1923
      %1989 = vst.msk [vmem:[%s275 + $0x168] sm:$0xff] %vm1943, %v1924
      %1990 = vst.msk [vmem:[%s275 + $0x170] sm:$0xff] %vm1943, %v1925
      %1991 = vst.msk [vmem:[%s275 + $0x178] sm:$0xff] %vm1943, %v1926
      %1992 = vst.msk [vmem:[%s275 + $0x180] sm:$0xff] %vm1943, %v1927
      %1993 = vst.msk [vmem:[%s275 + $0x188] sm:$0xff] %vm1943, %v1928
      %1994 = vst.msk [vmem:[%s275 + $0x190] sm:$0xff] %vm1943, %v1929
      %1995 = vst.msk [vmem:[%s275 + $0x198] sm:$0xff] %vm1943, %v1930
      %1996 = vst.msk [vmem:[%s275 + $0x1a0] sm:$0xff] %vm1943, %v1931
      %1997 = vst.msk [vmem:[%s275 + $0x1a8] sm:$0xff] %vm1943, %v1932
      %1998 = vst.msk [vmem:[%s275 + $0x1b0] sm:$0xff] %vm1943, %v1933
      %1999 = vst.msk [vmem:[%s275 + $0x1b8] sm:$0xff] %vm1943, %v1934
      %2000 = vst.msk [vmem:[%s275 + $0x1c0] sm:$0xff] %vm1943, %v1935
      %2001 = vst.msk [vmem:[%s275 + $0x1c8] sm:$0xff] %vm1943, %v1936
      %2002 = vst.msk [vmem:[%s275 + $0x1d0] sm:$0xff] %vm1943, %v1937
      %2003 = vst.msk [vmem:[%s275 + $0x1d8] sm:$0xff] %vm1943, %v1938
      %2004 = vst.msk [vmem:[%s275 + $0x1e0] sm:$0xff] %vm1943, %v1939
      %2005 = vst.msk [vmem:[%s275 + $0x1e8] sm:$0xff] %vm1943, %v1940
      %2006 = vst.msk [vmem:[%s275 + $0x1f0] sm:$0xff] %vm1943, %v1941
      %2007 = vst.msk [vmem:[%s275 + $0x1f8] sm:$0xff] %vm1943, %v1942
      %s2008 = smul.u32 64, %s17
      %p2009 = scmp.lt.s32.totalorder %s2008, 127
      %s2010 = scalar_select %p2009, %s2008, 127
      %s2011 = smul.addr %s2010, 8
      %s2012 = scalar_lea.vmem %s6, %s2011
      // Predicated region
      $region45: #{quantile_model_forward.1} parent=43 // pred_check
        %p2013 = pneg %p171
      $region46: #{quantile_model_forward.1} parent=43 // pred_check_branch
        %2015 = sbr.rel (%p2013) target = $region48
      $region47: #{quantile_model_forward.1} parent=43 // pred_region
        %s2016 = smul.u32 64, %s17
      $region48: #{quantile_model_forward.1} parent=43 // pred_fallthru
        _
    $region44: #{quantile_model_forward.1} parent=5 // pred_fallthru
      _
    %p2017 = scmp.le.s32.totalorder 2, %s12
    // Predicated region
    $region49: #{quantile_model_forward.1} parent=5 // pred_check
      %p2018 = pneg %p2017
    $region50: #{quantile_model_forward.1} parent=5 // pred_check_branch
      %2020 = sbr.rel (%p2018) target = $region52
    $region51: #{quantile_model_forward.1} parent=5 // pred_region
      %s2021 = ssub.s32 %s12, 2
      // Predicated region
      $region53: #{quantile_model_forward.1} parent=51 // pred_check
        %p2022 = pneg %p177
      $region54: #{quantile_model_forward.1} parent=51 // pred_check_branch
        %2024 = sbr.rel (%p2022) target = $region56
      $region55: #{quantile_model_forward.1} parent=51 // pred_region
        %s2025 = smul.u32 64, %s18
        %p2026 = scmp.lt.s32.totalorder %s2025, 127
        %s2027 = scalar_select %p2026, %s2025, 127
        %s2028 = smul.addr %s2027, 8
        %s2029 = scalar_lea.vmem %s6, %s2028
      $region56: #{quantile_model_forward.1} parent=51 // pred_fallthru
        _
    $region52: #{quantile_model_forward.1} parent=5 // pred_fallthru
      _
  $region6: #{quantile_model_forward.1} parent=0 // loop_footer
    %s16 = sadd.s32 1, %s12
  $region7: #{quantile_model_forward.1} parent=0 // loop_footer_branch
    %11 = sbr.rel target = $region3
  $region8: #{quantile_model_forward.1} parent=0 // loop_exit
    _

</llo_original>
